<compile_context>
chip_gen: v6e
topology: v6e:2x2x1
jax: 0.10.0
libtpu: 0.0.40
codegen_flags: <defaults>
</compile_context>

<pallas_src>
import functools

import jax
import jax.numpy as jnp
from jax.experimental import pallas as pl
from jax.experimental.pallas import tpu as pltpu

# dtype fed to the MXU for the conv matmul (accumulation stays f32).
MXU_DTYPE = jnp.bfloat16
# Explicit scoped-VMEM budget, safe on every generation.
_VMEM_LIMIT = 32 * 1024 * 1024
# Spatial (lane) tile of the conv matmul grid.
_CONV_TILE_M = 1024


def _largest_tile(total, candidates=(4096, 2048, 1024, 512, 256, 128)):
    """Largest candidate tile that evenly divides `total` (else `total`)."""
    for t in candidates:
        if total % t == 0:
            return t
    return total


# ----------------------------------------------------------------------------
# Kernel 1: fused composite + batch stacking
#   out[0] = fake, out[1] = real, out[2] = fake*(1-mask) + real*mask
#   Lane-dense (H*W on lanes); mask broadcast over channels inside the kernel.
# ----------------------------------------------------------------------------
def _stack_composite_kernel(fake_ref, real_ref, mask_ref, out_ref):
    m = mask_ref[...]                                  # (1, 1, T)
    f = fake_ref[...]                                  # (1, C, T)
    r = real_ref[...]                                  # (1, C, T)
    out_ref[0] = f
    out_ref[1] = r
    out_ref[2] = f * (1.0 - m) + r * m


def stack_with_composite(fake, real, mask):
    """fake/real: (N, C, H, W); mask: (N, 1, H, W).

    Returns the stacked batch (3N, C, H, W) = [fake | real | comp] in one pass.
    """
    N, C, H, W = fake.shape
    HW = H * W
    f2 = fake.reshape(N, C, HW)
    r2 = real.reshape(N, C, HW)
    m2 = mask.astype(fake.dtype).reshape(N, 1, HW)     # NOT broadcast in HBM
    tile = _largest_tile(HW)
    grid = (N, HW // tile)
    out = pl.pallas_call(
        _stack_composite_kernel,
        out_shape=jax.ShapeDtypeStruct((3, N, C, HW), fake.dtype),
        grid_spec=pltpu.PrefetchScalarGridSpec(
            num_scalar_prefetch=0,
            grid=grid,
            in_specs=[pl.BlockSpec((1, C, tile), lambda n, t: (n, 0, t)),
                      pl.BlockSpec((1, C, tile), lambda n, t: (n, 0, t)),
                      pl.BlockSpec((1, 1, tile), lambda n, t: (n, 0, t))],
            out_specs=pl.BlockSpec((3, 1, C, tile),
                                   lambda n, t: (0, n, 0, t))),
        compiler_params=pltpu.CompilerParams(
            dimension_semantics=("parallel", "parallel"),
            vmem_limit_bytes=_VMEM_LIMIT),
    )(f2, r2, m2)
    # (3, N, C, HW) -> (3N, C, H, W) is a pure view (contiguous reshape).
    return out.reshape(3 * N, C, H, W)


# ----------------------------------------------------------------------------
# Kernel 2: fused conv-as-matmul + bias + ReLU, lane-dense output (Cout, M)
# ----------------------------------------------------------------------------
def _conv_mm_kernel(w_ref, p_ref, b_ref, o_ref):
    # (Cout, K) @ (K, TILE_M) -> (Cout, TILE_M); spatial axis on lanes.
    acc = jnp.dot(w_ref[...], p_ref[...], preferred_element_type=jnp.float32)
    o_ref[...] = jnp.maximum(acc + b_ref[...], 0.0)


def conv3x3_s2_relu(x_cbhw, w, b):
    """3x3 conv, stride 2, pad 1, + bias + ReLU over channels-first activations.

    x_cbhw: (Cin, B, H, W)   w: (3, 3, Cin, Cout)   b: (Cout,)
    Returns (y, Ho, Wo) with y: (Cout, B*Ho*Wo) float32 (lane-dense).
    """
    Cin, B, H, W = x_cbhw.shape
    Cout = w.shape[-1]
    Ho = (H - 1) // 2 + 1
    Wo = (W - 1) // 2 + 1
    M = B * Ho * Wo
    K = 9 * Cin

    # im2col built directly in the transposed (K, M) layout -- XLA glue only.
    # TODO(synk): fuse im2col into the Pallas kernel (halo'd input BlockSpec +
    # 9 in-kernel strided taps) to remove this (K, M) HBM round-trip entirely.
    xp = jnp.pad(x_cbhw, ((0, 0), (0, 0), (1, 1), (1, 1)))
    taps = []
    for kh in range(3):
        for kw in range(3):
            t = xp[:, :, kh:kh + 2 * Ho:2, kw:kw + 2 * Wo:2]   # (Cin,B,Ho,Wo)
            taps.append(t.reshape(Cin, M))
    pT = jnp.concatenate(taps, axis=0).astype(MXU_DTYPE)        # (K, M) bf16
    wT = jnp.transpose(w, (3, 0, 1, 2)).reshape(Cout, K).astype(MXU_DTYPE)
    b2 = b.astype(jnp.float32).reshape(Cout, 1)

    if M <= _CONV_TILE_M:
        tile_m, m_pad = M, M
    else:
        tile_m = _CONV_TILE_M
        m_pad = ((M + tile_m - 1) // tile_m) * tile_m
        if m_pad != M:
            pT = jnp.pad(pT, ((0, 0), (0, m_pad - M)))

    y = pl.pallas_call(
        _conv_mm_kernel,
        out_shape=jax.ShapeDtypeStruct((Cout, m_pad), jnp.float32),
        grid_spec=pltpu.PrefetchScalarGridSpec(
            num_scalar_prefetch=0,
            grid=(m_pad // tile_m,),
            in_specs=[pl.BlockSpec((Cout, K), lambda i: (0, 0)),     # resident
                      pl.BlockSpec((K, tile_m), lambda i: (0, i)),   # streamed
                      pl.BlockSpec((Cout, 1), lambda i: (0, 0))],    # resident
            out_specs=pl.BlockSpec((Cout, tile_m), lambda i: (0, i))),
        compiler_params=pltpu.CompilerParams(
            dimension_semantics=("parallel",),
            vmem_limit_bytes=_VMEM_LIMIT),
    )(wT, pT, b2)
    if m_pad != M:
        y = y[:, :M]
    return y, Ho, Wo


# ----------------------------------------------------------------------------
# Kernel 3: gridded L1 pair reduction  sum|f-r| + sum|c-r|
#   Reads fake/real/comp column windows of the stacked conv output directly.
# ----------------------------------------------------------------------------
def _l1_pair_kernel(f_ref, r_ref, c_ref, o_ref, acc_ref):
    @pl.when(pl.program_id(0) == 0)
    def _():
        acc_ref[...] = jnp.zeros_like(acc_ref)

    r = r_ref[...]
    acc_ref[...] += (jnp.sum(jnp.abs(f_ref[...] - r), keepdims=True)
                     + jnp.sum(jnp.abs(c_ref[...] - r), keepdims=True))
    o_ref[...] = acc_ref[...]


def l1_pair_stacked(y, cols_per_role):
    """mean|f-r| + mean|c-r| where y = [fake | real | comp] along columns."""
    Cout = y.shape[0]
    Mr = cols_per_role
    if Mr % 128 == 0:
        # Lane-dense gridded reduction over column windows of the stacked
        # output; the same array is passed three times with offset index maps
        # (no XLA-side feature slicing / copies).
        tile = _largest_tile(Mr, (2048, 1024, 512, 256, 128))
        nsteps = Mr // tile
        inputs = (y, y, y)
        in_specs = [pl.BlockSpec((Cout, tile), lambda j: (0, j)),
                    pl.BlockSpec((Cout, tile), lambda j: (0, j + nsteps)),
                    pl.BlockSpec((Cout, tile), lambda j: (0, j + 2 * nsteps))]
    else:
        # Tiny deep levels: three full-dim blocks (single grid step).
        tile, nsteps = Mr, 1
        inputs = (y[:, :Mr], y[:, Mr:2 * Mr], y[:, 2 * Mr:3 * Mr])
        in_specs = [pl.BlockSpec((Cout, Mr), lambda j: (0, 0))
                    for _ in range(3)]

    s = pl.pallas_call(
        _l1_pair_kernel,
        out_shape=jax.ShapeDtypeStruct((1, 1), jnp.float32),
        grid_spec=pltpu.PrefetchScalarGridSpec(
            num_scalar_prefetch=0,
            grid=(nsteps,),
            in_specs=in_specs,
            out_specs=pl.BlockSpec((1, 1), lambda j: (0, 0)),
            scratch_shapes=[pltpu.VMEM((1, 1), jnp.float32)]),
        compiler_params=pltpu.CompilerParams(
            dimension_semantics=("arbitrary",),
            vmem_limit_bytes=_VMEM_LIMIT),
    )(*inputs)
    return s[0, 0] / jnp.float32(Cout * Mr)


# ----------------------------------------------------------------------------
# Synthetic feature extractor (deterministic conv pyramid) + PerceptualLoss
# ----------------------------------------------------------------------------
def make_extractor_params(key, in_ch=4, chans=(8, 16, 32)):
    params = []
    c_prev = in_ch
    for i, c_out in enumerate(chans):
        kw_key, kb_key = jax.random.split(jax.random.fold_in(key, i))
        fan_in = 9 * c_prev
        w = jax.random.normal(kw_key, (3, 3, c_prev, c_out), jnp.float32)
        w = w * (1.0 / jnp.sqrt(jnp.float32(fan_in)))
        b = 0.01 * jax.random.normal(kb_key, (c_out,), jnp.float32)
        params.append((w, b))
        c_prev = c_out
    return params


def perceptual_loss(fake_img, real_img, mask, params, n_features=3):
    N = fake_img.shape[0]

    # One Pallas pass builds the stacked batch [fake | real | comp] (composite
    # computed in-kernel), then the extractor runs once over all 3N images.
    stacked = stack_with_composite(fake_img, real_img, mask)   # (3N, C, H, W)
    x = jnp.transpose(stacked, (1, 0, 2, 3))                   # (C, 3N, H, W)
    B = 3 * N

    loss = jnp.float32(0.0)
    for (w, b) in params[:n_features]:
        y, Ho, Wo = conv3x3_s2_relu(x, w, b)          # (Cout, B*Ho*Wo)
        loss = loss + l1_pair_stacked(y, N * Ho * Wo)
        x = y.reshape(w.shape[-1], B, Ho, Wo)         # next level, channels-first
    return loss


# ----------------------------------------------------------------------------
if __name__ == "__main__":
    key = jax.random.PRNGKey(0)
    k_fake, k_real, k_mask, k_params = jax.random.split(key, 4)

    N, C, H, W = 2, 4, 16, 16
    fake_img = jax.random.normal(k_fake, (N, C, H, W), jnp.float32)
    real_img = jax.random.normal(k_real, (N, C, H, W), jnp.float32)
    # 1 = valid pixel, 0 = hole
    mask = (jax.random.uniform(k_mask, (N, 1, H, W)) > 0.5).astype(jnp.float32)

    params = make_extractor_params(k_params, in_ch=C, chans=(8, 16, 32))

    loss_fn = jax.jit(functools.partial(perceptual_loss, n_features=3))
    loss = loss_fn(fake_img, real_img, mask, params)
    loss = jax.block_until_ready(loss)

    assert loss.shape == () and jnp.isfinite(loss)
    print("KERNEL_OK")
</pallas_src>

<mosaic_0001>
module attributes {stable_mosaic.version = 11 : i64} {
  func.func @_stack_composite_kernel(%arg0: i32, %arg1: i32, %arg2: memref<1x4x256xf32, #tpu.memory_space<vmem>>, %arg3: memref<1x4x256xf32, #tpu.memory_space<vmem>>, %arg4: memref<1x1x256xf32, #tpu.memory_space<vmem>>, %arg5: memref<3x1x4x256xf32, #tpu.memory_space<vmem>>) attributes {dimension_semantics = [#tpu.dimension_semantics<parallel>, #tpu.dimension_semantics<parallel>], iteration_bounds = array<i64: 2, 1>, scalar_prefetch = 0 : i64, scratch_operands = 0 : i64, tpu.core_type = #tpu.core_type<tc>, window_params = [{transform_indices = @transform_0, window_bounds = array<i64: 1, 4, 256>}, {transform_indices = @transform_1, window_bounds = array<i64: 1, 4, 256>}, {transform_indices = @transform_2, window_bounds = array<i64: 1, 1, 256>}, {transform_indices = @transform_3, window_bounds = array<i64: 3, 1, 4, 256>}]} {
    %c0 = arith.constant 0 : index
    %c0_0 = arith.constant 0 : index
    %c0_1 = arith.constant 0 : index
    %0 = vector.load %arg4[%c0, %c0_0, %c0_1] : memref<1x1x256xf32, #tpu.memory_space<vmem>>, vector<1x1x256xf32>
    %c0_2 = arith.constant 0 : index
    %c0_3 = arith.constant 0 : index
    %c0_4 = arith.constant 0 : index
    %1 = vector.load %arg2[%c0_2, %c0_3, %c0_4] : memref<1x4x256xf32, #tpu.memory_space<vmem>>, vector<1x4x256xf32>
    %c0_5 = arith.constant 0 : index
    %c0_6 = arith.constant 0 : index
    %c0_7 = arith.constant 0 : index
    %2 = vector.load %arg3[%c0_5, %c0_6, %c0_7] : memref<1x4x256xf32, #tpu.memory_space<vmem>>, vector<1x4x256xf32>
    %c0_8 = arith.constant 0 : index
    %c0_9 = arith.constant 0 : index
    %c0_10 = arith.constant 0 : index
    %c0_11 = arith.constant 0 : index
    %3 = vector.load %arg5[%c0_8, %c0_9, %c0_10, %c0_11] : memref<3x1x4x256xf32, #tpu.memory_space<vmem>>, vector<1x1x4x256xf32>
    %4 = vector.shape_cast %3 : vector<1x1x4x256xf32> to vector<1x4x256xf32>
    %5 = vector.shape_cast %1 : vector<1x4x256xf32> to vector<1x1x4x256xf32>
    tpu.vector_store %arg5[%c0_8, %c0_9, %c0_10, %c0_11], %5 {strides = array<i32>} : memref<3x1x4x256xf32, #tpu.memory_space<vmem>>, vector<1x1x4x256xf32>,
    %c1 = arith.constant 1 : index
    %c0_12 = arith.constant 0 : index
    %c0_13 = arith.constant 0 : index
    %c0_14 = arith.constant 0 : index
    %6 = vector.load %arg5[%c1, %c0_12, %c0_13, %c0_14] : memref<3x1x4x256xf32, #tpu.memory_space<vmem>>, vector<1x1x4x256xf32>
    %7 = vector.shape_cast %6 : vector<1x1x4x256xf32> to vector<1x4x256xf32>
    %8 = vector.shape_cast %2 : vector<1x4x256xf32> to vector<1x1x4x256xf32>
    tpu.vector_store %arg5[%c1, %c0_12, %c0_13, %c0_14], %8 {strides = array<i32>} : memref<3x1x4x256xf32, #tpu.memory_space<vmem>>, vector<1x1x4x256xf32>,
    %cst = arith.constant 1.000000e+00 : f32
    %9 = vector.broadcast %cst : f32 to vector<1x1x256xf32>
    %10 = arith.subf %9, %0 : vector<1x1x256xf32>
    %11 = vector.broadcast %10 : vector<1x1x256xf32> to vector<1x4x256xf32>
    %12 = arith.mulf %1, %11 : vector<1x4x256xf32>
    %13 = vector.broadcast %0 : vector<1x1x256xf32> to vector<1x4x256xf32>
    %14 = arith.mulf %2, %13 : vector<1x4x256xf32>
    %15 = arith.addf %12, %14 : vector<1x4x256xf32>
    %c2 = arith.constant 2 : index
    %c0_15 = arith.constant 0 : index
    %c0_16 = arith.constant 0 : index
    %c0_17 = arith.constant 0 : index
    %16 = vector.load %arg5[%c2, %c0_15, %c0_16, %c0_17] : memref<3x1x4x256xf32, #tpu.memory_space<vmem>>, vector<1x1x4x256xf32>
    %17 = vector.shape_cast %16 : vector<1x1x4x256xf32> to vector<1x4x256xf32>
    %18 = vector.shape_cast %15 : vector<1x4x256xf32> to vector<1x1x4x256xf32>
    tpu.vector_store %arg5[%c2, %c0_15, %c0_16, %c0_17], %18 {strides = array<i32>} : memref<3x1x4x256xf32, #tpu.memory_space<vmem>>, vector<1x1x4x256xf32>,
    return
  }
  func.func @transform_0(%arg0: i32, %arg1: i32) -> (i32, i32, i32) {
    %c0_i32 = arith.constant 0 : i32
    %c0_i32_0 = arith.constant 0 : i32
    return %arg0, %c0_i32, %arg1 : i32, i32, i32
  }
  func.func @transform_1(%arg0: i32, %arg1: i32) -> (i32, i32, i32) {
    %c0_i32 = arith.constant 0 : i32
    %c0_i32_0 = arith.constant 0 : i32
    return %arg0, %c0_i32, %arg1 : i32, i32, i32
  }
  func.func @transform_2(%arg0: i32, %arg1: i32) -> (i32, i32, i32) {
    %c0_i32 = arith.constant 0 : i32
    %c0_i32_0 = arith.constant 0 : i32
    return %arg0, %c0_i32, %arg1 : i32, i32, i32
  }
  func.func @transform_3(%arg0: i32, %arg1: i32) -> (i32, i32, i32, i32) {
    %c0_i32 = arith.constant 0 : i32
    %c0_i32_0 = arith.constant 0 : i32
    %c0_i32_1 = arith.constant 0 : i32
    return %c0_i32, %arg0, %c0_i32_0, %arg1 : i32, i32, i32, i32
  }
}

module attributes {stable_mosaic.version = 11 : i64} {
  func.func @_conv_mm_kernel(%arg0: i32, %arg1: memref<8x36xbf16, #tpu.memory_space<vmem>>, %arg2: memref<36x384xbf16, #tpu.memory_space<vmem>>, %arg3: memref<8x1xf32, #tpu.memory_space<vmem>>, %arg4: memref<8x384xf32, #tpu.memory_space<vmem>>) attributes {dimension_semantics = [#tpu.dimension_semantics<parallel>], iteration_bounds = array<i64: 1>, scalar_prefetch = 0 : i64, scratch_operands = 0 : i64, tpu.core_type = #tpu.core_type<tc>, window_params = [{pipeline_mode = #tpu.pipeline_mode<synchronous>, transform_indices = @transform_0, window_bounds = array<i64: 8, 36>}, {transform_indices = @transform_1, window_bounds = array<i64: 36, 384>}, {pipeline_mode = #tpu.pipeline_mode<synchronous>, transform_indices = @transform_2, window_bounds = array<i64: 8, 1>}, {transform_indices = @transform_3, window_bounds = array<i64: 8, 384>}]} {
    %c0 = arith.constant 0 : index
    %c0_0 = arith.constant 0 : index
    %0 = vector.load %arg1[%c0, %c0_0] : memref<8x36xbf16, #tpu.memory_space<vmem>>, vector<8x36xbf16>
    %c0_1 = arith.constant 0 : index
    %c0_2 = arith.constant 0 : index
    %1 = vector.load %arg2[%c0_1, %c0_2] : memref<36x384xbf16, #tpu.memory_space<vmem>>, vector<36x384xbf16>
    %cst = arith.constant dense<0.000000e+00> : vector<8x384xf32>
    %2 = tpu.matmul %0, %1, %cst {dimension_numbers = #tpu.dot_dimension_numbers<[1], [0], [0], [1], [0, 0, 1, 1], [], []>} : vector<8x36xbf16>, vector<36x384xbf16>, vector<8x384xf32> -> vector<8x384xf32>
    %c0_3 = arith.constant 0 : index
    %c0_4 = arith.constant 0 : index
    %3 = vector.load %arg3[%c0_3, %c0_4] : memref<8x1xf32, #tpu.memory_space<vmem>>, vector<8x1xf32>
    %4 = vector.broadcast %3 : vector<8x1xf32> to vector<8x384xf32>
    %5 = arith.addf %2, %4 : vector<8x384xf32>
    %cst_5 = arith.constant 0.000000e+00 : f32
    %6 = vector.broadcast %cst_5 : f32 to vector<8x384xf32>
    %7 = arith.maximumf %5, %6 : vector<8x384xf32>
    %c0_6 = arith.constant 0 : index
    %c0_7 = arith.constant 0 : index
    %8 = vector.load %arg4[%c0_6, %c0_7] : memref<8x384xf32, #tpu.memory_space<vmem>>, vector<8x384xf32>
    tpu.vector_store %arg4[%c0_6, %c0_7], %7 {strides = array<i32>} : memref<8x384xf32, #tpu.memory_space<vmem>>, vector<8x384xf32>,
    return
  }
  func.func @transform_0(%arg0: i32) -> (i32, i32) {
    %c0_i32 = arith.constant 0 : i32
    %c0_i32_0 = arith.constant 0 : i32
    %c0_i32_1 = arith.constant 0 : i32
    return %c0_i32, %c0_i32_0 : i32, i32
  }
  func.func @transform_1(%arg0: i32) -> (i32, i32) {
    %c0_i32 = arith.constant 0 : i32
    %c0_i32_0 = arith.constant 0 : i32
    return %c0_i32, %arg0 : i32, i32
  }
  func.func @transform_2(%arg0: i32) -> (i32, i32) {
    %c0_i32 = arith.constant 0 : i32
    %c0_i32_0 = arith.constant 0 : i32
    %c0_i32_1 = arith.constant 0 : i32
    return %c0_i32, %c0_i32_0 : i32, i32
  }
  func.func @transform_3(%arg0: i32) -> (i32, i32) {
    %c0_i32 = arith.constant 0 : i32
    %c0_i32_0 = arith.constant 0 : i32
    return %c0_i32, %arg0 : i32, i32
  }
}

module attributes {stable_mosaic.version = 11 : i64} {
  func.func @_l1_pair_kernel(%arg0: i32, %arg1: memref<8x128xf32, #tpu.memory_space<vmem>>, %arg2: memref<8x128xf32, #tpu.memory_space<vmem>>, %arg3: memref<8x128xf32, #tpu.memory_space<vmem>>, %arg4: memref<1x1xf32, #tpu.memory_space<vmem>>, %arg5: memref<1x1xf32, #tpu.memory_space<vmem>>) attributes {dimension_semantics = [#tpu.dimension_semantics<arbitrary>], iteration_bounds = array<i64: 1>, scalar_prefetch = 0 : i64, scratch_operands = 1 : i64, tpu.core_type = #tpu.core_type<tc>, window_params = [{transform_indices = @transform_0, window_bounds = array<i64: 8, 128>}, {transform_indices = @transform_1, window_bounds = array<i64: 8, 128>}, {transform_indices = @transform_2, window_bounds = array<i64: 8, 128>}, {pipeline_mode = #tpu.pipeline_mode<synchronous>, transform_indices = @transform_3, window_bounds = array<i64: 1, 1>}]} {
    %c0_i32 = arith.constant 0 : i32
    %0 = arith.cmpi eq, %arg0, %c0_i32 : i32
    %1 = arith.extui %0 : i1 to i32
    %c0_i32_0 = arith.constant 0 : i32
    %2 = arith.cmpi ne, %1, %c0_i32_0 : i32
    scf.if %2 {
      %cst_15 = arith.constant 0.000000e+00 : f32
      %26 = vector.broadcast %cst_15 : f32 to vector<1x1xf32>
      %c0_16 = arith.constant 0 : index
      %c0_17 = arith.constant 0 : index
      %27 = vector.load %arg5[%c0_16, %c0_17] : memref<1x1xf32, #tpu.memory_space<vmem>>, vector<1x1xf32>
      tpu.vector_store %arg5[%c0_16, %c0_17], %26 {strides = array<i32>} : memref<1x1xf32, #tpu.memory_space<vmem>>, vector<1x1xf32>,
    } else {
    }
    %c0 = arith.constant 0 : index
    %c0_1 = arith.constant 0 : index
    %3 = vector.load %arg2[%c0, %c0_1] : memref<8x128xf32, #tpu.memory_space<vmem>>, vector<8x128xf32>
    %c0_2 = arith.constant 0 : index
    %c0_3 = arith.constant 0 : index
    %4 = vector.load %arg5[%c0_2, %c0_3] : memref<1x1xf32, #tpu.memory_space<vmem>>, vector<1x1xf32>
    %c0_4 = arith.constant 0 : index
    %c0_5 = arith.constant 0 : index
    %5 = vector.load %arg1[%c0_4, %c0_5] : memref<8x128xf32, #tpu.memory_space<vmem>>, vector<8x128xf32>
    %6 = arith.subf %5, %3 : vector<8x128xf32>
    %7 = math.absf %6 : vector<8x128xf32>
    %8 = vector.shape_cast %7 : vector<8x128xf32> to vector<1x8x128xf32>
    %cst = arith.constant dense<0.000000e+00> : vector<1xf32>
    %9 = vector.multi_reduction <add>, %8, %cst [1, 2] : vector<1x8x128xf32> to vector<1xf32>
    %10 = vector.shape_cast %9 : vector<1xf32> to vector<1x1x1xf32>
    %11 = vector.extract %10[0, 0, 0] : f32 from vector<1x1x1xf32>
    %12 = vector.broadcast %11 : f32 to vector<1x1xf32>
    %c0_6 = arith.constant 0 : index
    %c0_7 = arith.constant 0 : index
    %13 = vector.load %arg3[%c0_6, %c0_7] : memref<8x128xf32, #tpu.memory_space<vmem>>, vector<8x128xf32>
    %14 = arith.subf %13, %3 : vector<8x128xf32>
    %15 = math.absf %14 : vector<8x128xf32>
    %16 = vector.shape_cast %15 : vector<8x128xf32> to vector<1x8x128xf32>
    %cst_8 = arith.constant dense<0.000000e+00> : vector<1xf32>
    %17 = vector.multi_reduction <add>, %16, %cst_8 [1, 2] : vector<1x8x128xf32> to vector<1xf32>
    %18 = vector.shape_cast %17 : vector<1xf32> to vector<1x1x1xf32>
    %19 = vector.extract %18[0, 0, 0] : f32 from vector<1x1x1xf32>
    %20 = vector.broadcast %19 : f32 to vector<1x1xf32>
    %21 = arith.addf %12, %20 : vector<1x1xf32>
    %22 = arith.addf %4, %21 : vector<1x1xf32>
    %c0_9 = arith.constant 0 : index
    %c0_10 = arith.constant 0 : index
    %23 = vector.load %arg5[%c0_9, %c0_10] : memref<1x1xf32, #tpu.memory_space<vmem>>, vector<1x1xf32>
    tpu.vector_store %arg5[%c0_9, %c0_10], %22 {strides = array<i32>} : memref<1x1xf32, #tpu.memory_space<vmem>>, vector<1x1xf32>,
    %c0_11 = arith.constant 0 : index
    %c0_12 = arith.constant 0 : index
    %24 = vector.load %arg5[%c0_11, %c0_12] : memref<1x1xf32, #tpu.memory_space<vmem>>, vector<1x1xf32>
    %c0_13 = arith.constant 0 : index
    %c0_14 = arith.constant 0 : index
    %25 = vector.load %arg4[%c0_13, %c0_14] : memref<1x1xf32, #tpu.memory_space<vmem>>, vector<1x1xf32>
    tpu.vector_store %arg4[%c0_13, %c0_14], %24 {strides = array<i32>} : memref<1x1xf32, #tpu.memory_space<vmem>>, vector<1x1xf32>,
    return
  }
  func.func @transform_0(%arg0: i32) -> (i32, i32) {
    %c0_i32 = arith.constant 0 : i32
    %c0_i32_0 = arith.constant 0 : i32
    return %c0_i32, %arg0 : i32, i32
  }
  func.func @transform_1(%arg0: i32) -> (i32, i32) {
    %c1_i32 = arith.constant 1 : i32
    %0 = arith.addi %arg0, %c1_i32 : i32
    %c0_i32 = arith.constant 0 : i32
    %c0_i32_0 = arith.constant 0 : i32
    return %c0_i32, %0 : i32, i32
  }
  func.func @transform_2(%arg0: i32) -> (i32, i32) {
    %c2_i32 = arith.constant 2 : i32
    %0 = arith.addi %arg0, %c2_i32 : i32
    %c0_i32 = arith.constant 0 : i32
    %c0_i32_0 = arith.constant 0 : i32
    return %c0_i32, %0 : i32, i32
  }
  func.func @transform_3(%arg0: i32) -> (i32, i32) {
    %c0_i32 = arith.constant 0 : i32
    %c0_i32_0 = arith.constant 0 : i32
    %c0_i32_1 = arith.constant 0 : i32
    return %c0_i32, %c0_i32_0 : i32, i32
  }
}

module attributes {stable_mosaic.version = 11 : i64} {
  func.func @_l1_pair_kernel(%arg0: i32, %arg1: memref<16x32xf32, #tpu.memory_space<vmem>>, %arg2: memref<16x32xf32, #tpu.memory_space<vmem>>, %arg3: memref<16x32xf32, #tpu.memory_space<vmem>>, %arg4: memref<1x1xf32, #tpu.memory_space<vmem>>, %arg5: memref<1x1xf32, #tpu.memory_space<vmem>>) attributes {dimension_semantics = [#tpu.dimension_semantics<arbitrary>], iteration_bounds = array<i64: 1>, scalar_prefetch = 0 : i64, scratch_operands = 1 : i64, tpu.core_type = #tpu.core_type<tc>, window_params = [{pipeline_mode = #tpu.pipeline_mode<synchronous>, transform_indices = @transform_0, window_bounds = array<i64: 16, 32>}, {pipeline_mode = #tpu.pipeline_mode<synchronous>, transform_indices = @transform_1, window_bounds = array<i64: 16, 32>}, {pipeline_mode = #tpu.pipeline_mode<synchronous>, transform_indices = @transform_2, window_bounds = array<i64: 16, 32>}, {pipeline_mode = #tpu.pipeline_mode<synchronous>, transform_indices = @transform_3, window_bounds = array<i64: 1, 1>}]} {
    %c0_i32 = arith.constant 0 : i32
    %0 = arith.cmpi eq, %arg0, %c0_i32 : i32
    %1 = arith.extui %0 : i1 to i32
    %c0_i32_0 = arith.constant 0 : i32
    %2 = arith.cmpi ne, %1, %c0_i32_0 : i32
    scf.if %2 {
      %cst_15 = arith.constant 0.000000e+00 : f32
      %26 = vector.broadcast %cst_15 : f32 to vector<1x1xf32>
      %c0_16 = arith.constant 0 : index
      %c0_17 = arith.constant 0 : index
      %27 = vector.load %arg5[%c0_16, %c0_17] : memref<1x1xf32, #tpu.memory_space<vmem>>, vector<1x1xf32>
      tpu.vector_store %arg5[%c0_16, %c0_17], %26 {strides = array<i32>} : memref<1x1xf32, #tpu.memory_space<vmem>>, vector<1x1xf32>,
    } else {
    }
    %c0 = arith.constant 0 : index
    %c0_1 = arith.constant 0 : index
    %3 = vector.load %arg2[%c0, %c0_1] : memref<16x32xf32, #tpu.memory_space<vmem>>, vector<16x32xf32>
    %c0_2 = arith.constant 0 : index
    %c0_3 = arith.constant 0 : index
    %4 = vector.load %arg5[%c0_2, %c0_3] : memref<1x1xf32, #tpu.memory_space<vmem>>, vector<1x1xf32>
    %c0_4 = arith.constant 0 : index
    %c0_5 = arith.constant 0 : index
    %5 = vector.load %arg1[%c0_4, %c0_5] : memref<16x32xf32, #tpu.memory_space<vmem>>, vector<16x32xf32>
    %6 = arith.subf %5, %3 : vector<16x32xf32>
    %7 = math.absf %6 : vector<16x32xf32>
    %8 = vector.shape_cast %7 : vector<16x32xf32> to vector<1x16x32xf32>
    %cst = arith.constant dense<0.000000e+00> : vector<1xf32>
    %9 = vector.multi_reduction <add>, %8, %cst [1, 2] : vector<1x16x32xf32> to vector<1xf32>
    %10 = vector.shape_cast %9 : vector<1xf32> to vector<1x1x1xf32>
    %11 = vector.extract %10[0, 0, 0] : f32 from vector<1x1x1xf32>
    %12 = vector.broadcast %11 : f32 to vector<1x1xf32>
    %c0_6 = arith.constant 0 : index
    %c0_7 = arith.constant 0 : index
    %13 = vector.load %arg3[%c0_6, %c0_7] : memref<16x32xf32, #tpu.memory_space<vmem>>, vector<16x32xf32>
    %14 = arith.subf %13, %3 : vector<16x32xf32>
    %15 = math.absf %14 : vector<16x32xf32>
    %16 = vector.shape_cast %15 : vector<16x32xf32> to vector<1x16x32xf32>
    %cst_8 = arith.constant dense<0.000000e+00> : vector<1xf32>
    %17 = vector.multi_reduction <add>, %16, %cst_8 [1, 2] : vector<1x16x32xf32> to vector<1xf32>
    %18 = vector.shape_cast %17 : vector<1xf32> to vector<1x1x1xf32>
    %19 = vector.extract %18[0, 0, 0] : f32 from vector<1x1x1xf32>
    %20 = vector.broadcast %19 : f32 to vector<1x1xf32>
    %21 = arith.addf %12, %20 : vector<1x1xf32>
    %22 = arith.addf %4, %21 : vector<1x1xf32>
    %c0_9 = arith.constant 0 : index
    %c0_10 = arith.constant 0 : index
    %23 = vector.load %arg5[%c0_9, %c0_10] : memref<1x1xf32, #tpu.memory_space<vmem>>, vector<1x1xf32>
    tpu.vector_store %arg5[%c0_9, %c0_10], %22 {strides = array<i32>} : memref<1x1xf32, #tpu.memory_space<vmem>>, vector<1x1xf32>,
    %c0_11 = arith.constant 0 : index
    %c0_12 = arith.constant 0 : index
    %24 = vector.load %arg5[%c0_11, %c0_12] : memref<1x1xf32, #tpu.memory_space<vmem>>, vector<1x1xf32>
    %c0_13 = arith.constant 0 : index
    %c0_14 = arith.constant 0 : index
    %25 = vector.load %arg4[%c0_13, %c0_14] : memref<1x1xf32, #tpu.memory_space<vmem>>, vector<1x1xf32>
    tpu.vector_store %arg4[%c0_13, %c0_14], %24 {strides = array<i32>} : memref<1x1xf32, #tpu.memory_space<vmem>>, vector<1x1xf32>,
    return
  }
  func.func @transform_0(%arg0: i32) -> (i32, i32) {
    %c0_i32 = arith.constant 0 : i32
    %c0_i32_0 = arith.constant 0 : i32
    %c0_i32_1 = arith.constant 0 : i32
    return %c0_i32, %c0_i32_0 : i32, i32
  }
  func.func @transform_1(%arg0: i32) -> (i32, i32) {
    %c0_i32 = arith.constant 0 : i32
    %c0_i32_0 = arith.constant 0 : i32
    %c0_i32_1 = arith.constant 0 : i32
    return %c0_i32, %c0_i32_0 : i32, i32
  }
  func.func @transform_2(%arg0: i32) -> (i32, i32) {
    %c0_i32 = arith.constant 0 : i32
    %c0_i32_0 = arith.constant 0 : i32
    %c0_i32_1 = arith.constant 0 : i32
    return %c0_i32, %c0_i32_0 : i32, i32
  }
  func.func @transform_3(%arg0: i32) -> (i32, i32) {
    %c0_i32 = arith.constant 0 : i32
    %c0_i32_0 = arith.constant 0 : i32
    %c0_i32_1 = arith.constant 0 : i32
    return %c0_i32, %c0_i32_0 : i32, i32
  }
}

module attributes {stable_mosaic.version = 11 : i64} {
  func.func @_conv_mm_kernel(%arg0: i32, %arg1: memref<16x72xbf16, #tpu.memory_space<vmem>>, %arg2: memref<72x96xbf16, #tpu.memory_space<vmem>>, %arg3: memref<16x1xf32, #tpu.memory_space<vmem>>, %arg4: memref<16x96xf32, #tpu.memory_space<vmem>>) attributes {dimension_semantics = [#tpu.dimension_semantics<parallel>], iteration_bounds = array<i64: 1>, scalar_prefetch = 0 : i64, scratch_operands = 0 : i64, tpu.core_type = #tpu.core_type<tc>, window_params = [{pipeline_mode = #tpu.pipeline_mode<synchronous>, transform_indices = @transform_0, window_bounds = array<i64: 16, 72>}, {transform_indices = @transform_1, window_bounds = array<i64: 72, 96>}, {pipeline_mode = #tpu.pipeline_mode<synchronous>, transform_indices = @transform_2, window_bounds = array<i64: 16, 1>}, {transform_indices = @transform_3, window_bounds = array<i64: 16, 96>}]} {
    %c0 = arith.constant 0 : index
    %c0_0 = arith.constant 0 : index
    %0 = vector.load %arg1[%c0, %c0_0] : memref<16x72xbf16, #tpu.memory_space<vmem>>, vector<16x72xbf16>
    %c0_1 = arith.constant 0 : index
    %c0_2 = arith.constant 0 : index
    %1 = vector.load %arg2[%c0_1, %c0_2] : memref<72x96xbf16, #tpu.memory_space<vmem>>, vector<72x96xbf16>
    %cst = arith.constant dense<0.000000e+00> : vector<16x96xf32>
    %2 = tpu.matmul %0, %1, %cst {dimension_numbers = #tpu.dot_dimension_numbers<[1], [0], [0], [1], [0, 0, 1, 1], [], []>} : vector<16x72xbf16>, vector<72x96xbf16>, vector<16x96xf32> -> vector<16x96xf32>
    %c0_3 = arith.constant 0 : index
    %c0_4 = arith.constant 0 : index
    %3 = vector.load %arg3[%c0_3, %c0_4] : memref<16x1xf32, #tpu.memory_space<vmem>>, vector<16x1xf32>
    %4 = vector.broadcast %3 : vector<16x1xf32> to vector<16x96xf32>
    %5 = arith.addf %2, %4 : vector<16x96xf32>
    %cst_5 = arith.constant 0.000000e+00 : f32
    %6 = vector.broadcast %cst_5 : f32 to vector<16x96xf32>
    %7 = arith.maximumf %5, %6 : vector<16x96xf32>
    %c0_6 = arith.constant 0 : index
    %c0_7 = arith.constant 0 : index
    %8 = vector.load %arg4[%c0_6, %c0_7] : memref<16x96xf32, #tpu.memory_space<vmem>>, vector<16x96xf32>
    tpu.vector_store %arg4[%c0_6, %c0_7], %7 {strides = array<i32>} : memref<16x96xf32, #tpu.memory_space<vmem>>, vector<16x96xf32>,
    return
  }
  func.func @transform_0(%arg0: i32) -> (i32, i32) {
    %c0_i32 = arith.constant 0 : i32
    %c0_i32_0 = arith.constant 0 : i32
    %c0_i32_1 = arith.constant 0 : i32
    return %c0_i32, %c0_i32_0 : i32, i32
  }
  func.func @transform_1(%arg0: i32) -> (i32, i32) {
    %c0_i32 = arith.constant 0 : i32
    %c0_i32_0 = arith.constant 0 : i32
    return %c0_i32, %arg0 : i32, i32
  }
  func.func @transform_2(%arg0: i32) -> (i32, i32) {
    %c0_i32 = arith.constant 0 : i32
    %c0_i32_0 = arith.constant 0 : i32
    %c0_i32_1 = arith.constant 0 : i32
    return %c0_i32, %c0_i32_0 : i32, i32
  }
  func.func @transform_3(%arg0: i32) -> (i32, i32) {
    %c0_i32 = arith.constant 0 : i32
    %c0_i32_0 = arith.constant 0 : i32
    return %c0_i32, %arg0 : i32, i32
  }
}

module attributes {stable_mosaic.version = 11 : i64} {
  func.func @_l1_pair_kernel(%arg0: i32, %arg1: memref<32x8xf32, #tpu.memory_space<vmem>>, %arg2: memref<32x8xf32, #tpu.memory_space<vmem>>, %arg3: memref<32x8xf32, #tpu.memory_space<vmem>>, %arg4: memref<1x1xf32, #tpu.memory_space<vmem>>, %arg5: memref<1x1xf32, #tpu.memory_space<vmem>>) attributes {dimension_semantics = [#tpu.dimension_semantics<arbitrary>], iteration_bounds = array<i64: 1>, scalar_prefetch = 0 : i64, scratch_operands = 1 : i64, tpu.core_type = #tpu.core_type<tc>, window_params = [{pipeline_mode = #tpu.pipeline_mode<synchronous>, transform_indices = @transform_0, window_bounds = array<i64: 32, 8>}, {pipeline_mode = #tpu.pipeline_mode<synchronous>, transform_indices = @transform_1, window_bounds = array<i64: 32, 8>}, {pipeline_mode = #tpu.pipeline_mode<synchronous>, transform_indices = @transform_2, window_bounds = array<i64: 32, 8>}, {pipeline_mode = #tpu.pipeline_mode<synchronous>, transform_indices = @transform_3, window_bounds = array<i64: 1, 1>}]} {
    %c0_i32 = arith.constant 0 : i32
    %0 = arith.cmpi eq, %arg0, %c0_i32 : i32
    %1 = arith.extui %0 : i1 to i32
    %c0_i32_0 = arith.constant 0 : i32
    %2 = arith.cmpi ne, %1, %c0_i32_0 : i32
    scf.if %2 {
      %cst_15 = arith.constant 0.000000e+00 : f32
      %26 = vector.broadcast %cst_15 : f32 to vector<1x1xf32>
      %c0_16 = arith.constant 0 : index
      %c0_17 = arith.constant 0 : index
      %27 = vector.load %arg5[%c0_16, %c0_17] : memref<1x1xf32, #tpu.memory_space<vmem>>, vector<1x1xf32>
      tpu.vector_store %arg5[%c0_16, %c0_17], %26 {strides = array<i32>} : memref<1x1xf32, #tpu.memory_space<vmem>>, vector<1x1xf32>,
    } else {
    }
    %c0 = arith.constant 0 : index
    %c0_1 = arith.constant 0 : index
    %3 = vector.load %arg2[%c0, %c0_1] : memref<32x8xf32, #tpu.memory_space<vmem>>, vector<32x8xf32>
    %c0_2 = arith.constant 0 : index
    %c0_3 = arith.constant 0 : index
    %4 = vector.load %arg5[%c0_2, %c0_3] : memref<1x1xf32, #tpu.memory_space<vmem>>, vector<1x1xf32>
    %c0_4 = arith.constant 0 : index
    %c0_5 = arith.constant 0 : index
    %5 = vector.load %arg1[%c0_4, %c0_5] : memref<32x8xf32, #tpu.memory_space<vmem>>, vector<32x8xf32>
    %6 = arith.subf %5, %3 : vector<32x8xf32>
    %7 = math.absf %6 : vector<32x8xf32>
    %8 = vector.shape_cast %7 : vector<32x8xf32> to vector<1x32x8xf32>
    %cst = arith.constant dense<0.000000e+00> : vector<1xf32>
    %9 = vector.multi_reduction <add>, %8, %cst [1, 2] : vector<1x32x8xf32> to vector<1xf32>
    %10 = vector.shape_cast %9 : vector<1xf32> to vector<1x1x1xf32>
    %11 = vector.extract %10[0, 0, 0] : f32 from vector<1x1x1xf32>
    %12 = vector.broadcast %11 : f32 to vector<1x1xf32>
    %c0_6 = arith.constant 0 : index
    %c0_7 = arith.constant 0 : index
    %13 = vector.load %arg3[%c0_6, %c0_7] : memref<32x8xf32, #tpu.memory_space<vmem>>, vector<32x8xf32>
    %14 = arith.subf %13, %3 : vector<32x8xf32>
    %15 = math.absf %14 : vector<32x8xf32>
    %16 = vector.shape_cast %15 : vector<32x8xf32> to vector<1x32x8xf32>
    %cst_8 = arith.constant dense<0.000000e+00> : vector<1xf32>
    %17 = vector.multi_reduction <add>, %16, %cst_8 [1, 2] : vector<1x32x8xf32> to vector<1xf32>
    %18 = vector.shape_cast %17 : vector<1xf32> to vector<1x1x1xf32>
    %19 = vector.extract %18[0, 0, 0] : f32 from vector<1x1x1xf32>
    %20 = vector.broadcast %19 : f32 to vector<1x1xf32>
    %21 = arith.addf %12, %20 : vector<1x1xf32>
    %22 = arith.addf %4, %21 : vector<1x1xf32>
    %c0_9 = arith.constant 0 : index
    %c0_10 = arith.constant 0 : index
    %23 = vector.load %arg5[%c0_9, %c0_10] : memref<1x1xf32, #tpu.memory_space<vmem>>, vector<1x1xf32>
    tpu.vector_store %arg5[%c0_9, %c0_10], %22 {strides = array<i32>} : memref<1x1xf32, #tpu.memory_space<vmem>>, vector<1x1xf32>,
    %c0_11 = arith.constant 0 : index
    %c0_12 = arith.constant 0 : index
    %24 = vector.load %arg5[%c0_11, %c0_12] : memref<1x1xf32, #tpu.memory_space<vmem>>, vector<1x1xf32>
    %c0_13 = arith.constant 0 : index
    %c0_14 = arith.constant 0 : index
    %25 = vector.load %arg4[%c0_13, %c0_14] : memref<1x1xf32, #tpu.memory_space<vmem>>, vector<1x1xf32>
    tpu.vector_store %arg4[%c0_13, %c0_14], %24 {strides = array<i32>} : memref<1x1xf32, #tpu.memory_space<vmem>>, vector<1x1xf32>,
    return
  }
  func.func @transform_0(%arg0: i32) -> (i32, i32) {
    %c0_i32 = arith.constant 0 : i32
    %c0_i32_0 = arith.constant 0 : i32
    %c0_i32_1 = arith.constant 0 : i32
    return %c0_i32, %c0_i32_0 : i32, i32
  }
  func.func @transform_1(%arg0: i32) -> (i32, i32) {
    %c0_i32 = arith.constant 0 : i32
    %c0_i32_0 = arith.constant 0 : i32
    %c0_i32_1 = arith.constant 0 : i32
    return %c0_i32, %c0_i32_0 : i32, i32
  }
  func.func @transform_2(%arg0: i32) -> (i32, i32) {
    %c0_i32 = arith.constant 0 : i32
    %c0_i32_0 = arith.constant 0 : i32
    %c0_i32_1 = arith.constant 0 : i32
    return %c0_i32, %c0_i32_0 : i32, i32
  }
  func.func @transform_3(%arg0: i32) -> (i32, i32) {
    %c0_i32 = arith.constant 0 : i32
    %c0_i32_0 = arith.constant 0 : i32
    %c0_i32_1 = arith.constant 0 : i32
    return %c0_i32, %c0_i32_0 : i32, i32
  }
}

module attributes {stable_mosaic.version = 11 : i64} {
  func.func @_conv_mm_kernel(%arg0: i32, %arg1: memref<32x144xbf16, #tpu.memory_space<vmem>>, %arg2: memref<144x24xbf16, #tpu.memory_space<vmem>>, %arg3: memref<32x1xf32, #tpu.memory_space<vmem>>, %arg4: memref<32x24xf32, #tpu.memory_space<vmem>>) attributes {dimension_semantics = [#tpu.dimension_semantics<parallel>], iteration_bounds = array<i64: 1>, scalar_prefetch = 0 : i64, scratch_operands = 0 : i64, tpu.core_type = #tpu.core_type<tc>, window_params = [{pipeline_mode = #tpu.pipeline_mode<synchronous>, transform_indices = @transform_0, window_bounds = array<i64: 32, 144>}, {transform_indices = @transform_1, window_bounds = array<i64: 144, 24>}, {pipeline_mode = #tpu.pipeline_mode<synchronous>, transform_indices = @transform_2, window_bounds = array<i64: 32, 1>}, {transform_indices = @transform_3, window_bounds = array<i64: 32, 24>}]} {
    %c0 = arith.constant 0 : index
    %c0_0 = arith.constant 0 : index
    %0 = vector.load %arg1[%c0, %c0_0] : memref<32x144xbf16, #tpu.memory_space<vmem>>, vector<32x144xbf16>
    %c0_1 = arith.constant 0 : index
    %c0_2 = arith.constant 0 : index
    %1 = vector.load %arg2[%c0_1, %c0_2] : memref<144x24xbf16, #tpu.memory_space<vmem>>, vector<144x24xbf16>
    %cst = arith.constant dense<0.000000e+00> : vector<32x24xf32>
    %2 = tpu.matmul %0, %1, %cst {dimension_numbers = #tpu.dot_dimension_numbers<[1], [0], [0], [1], [0, 0, 1, 1], [], []>} : vector<32x144xbf16>, vector<144x24xbf16>, vector<32x24xf32> -> vector<32x24xf32>
    %c0_3 = arith.constant 0 : index
    %c0_4 = arith.constant 0 : index
    %3 = vector.load %arg3[%c0_3, %c0_4] : memref<32x1xf32, #tpu.memory_space<vmem>>, vector<32x1xf32>
    %4 = vector.broadcast %3 : vector<32x1xf32> to vector<32x24xf32>
    %5 = arith.addf %2, %4 : vector<32x24xf32>
    %cst_5 = arith.constant 0.000000e+00 : f32
    %6 = vector.broadcast %cst_5 : f32 to vector<32x24xf32>
    %7 = arith.maximumf %5, %6 : vector<32x24xf32>
    %c0_6 = arith.constant 0 : index
    %c0_7 = arith.constant 0 : index
    %8 = vector.load %arg4[%c0_6, %c0_7] : memref<32x24xf32, #tpu.memory_space<vmem>>, vector<32x24xf32>
    tpu.vector_store %arg4[%c0_6, %c0_7], %7 {strides = array<i32>} : memref<32x24xf32, #tpu.memory_space<vmem>>, vector<32x24xf32>,
    return
  }
  func.func @transform_0(%arg0: i32) -> (i32, i32) {
    %c0_i32 = arith.constant 0 : i32
    %c0_i32_0 = arith.constant 0 : i32
    %c0_i32_1 = arith.constant 0 : i32
    return %c0_i32, %c0_i32_0 : i32, i32
  }
  func.func @transform_1(%arg0: i32) -> (i32, i32) {
    %c0_i32 = arith.constant 0 : i32
    %c0_i32_0 = arith.constant 0 : i32
    return %c0_i32, %arg0 : i32, i32
  }
  func.func @transform_2(%arg0: i32) -> (i32, i32) {
    %c0_i32 = arith.constant 0 : i32
    %c0_i32_0 = arith.constant 0 : i32
    %c0_i32_1 = arith.constant 0 : i32
    return %c0_i32, %c0_i32_0 : i32, i32
  }
  func.func @transform_3(%arg0: i32) -> (i32, i32) {
    %c0_i32 = arith.constant 0 : i32
    %c0_i32_0 = arith.constant 0 : i32
    return %c0_i32, %arg0 : i32, i32
  }
}

</mosaic_0001>

<llo_original>
// kernel: perceptual_loss.7
$region0: #{perceptual_loss.7}
  #allocation0 [shape = 'u32[]', space=smem, size = 0x4, offset = 0x4, fixed_abs, tag = 'smem constant byte address 0x4 - core index']
  #allocation1 [shape = 'u32[144,128]{1,0:T(1,128)}', space=vmem, size = 0x12000, scoped, tag = 'internal scratch']
  %s0 = inlined_call_operand.vmem [shape: f32[2,4,256], index: 0, kind: input, shape index: {}]
  %s1 = inlined_call_operand.vmem [shape: f32[2,4,256], index: 1, kind: input, shape index: {}]
  %s2 = inlined_call_operand.vmem [shape: f32[2,1,256], index: 2, kind: input, shape index: {}]
  %s3 = inlined_call_operand.vmem [shape: f32[3,2,4,256], index: 3, kind: output, shape index: {}]
  %s4 = sld [smem:[#allocation0]]
  $region79: #{perceptual_loss.7} parent=0
    _
  %s6 = ssub.s32 1, %s4
  %s7 = scalar_select 0, %s6, %s4
  $region1: #{perceptual_loss.7} parent=0
    #allocation2 [shape = 'u8[24576]{0}', space=vmem, size = 0x6000, scoped, tag = 'output window, operand 0']
    loop: start=0, step=1, limit=4
    $region2: #{perceptual_loss.7} parent=1 // loop_pre_header
      _
    $region3: #{perceptual_loss.7} parent=1 // loop_header
      %s9 = sphi 0, %s13
      %p10 = scmp.ge.s32.totalorder %s9, 4
      %s16 = sphi 0, %s28
      %s17 = sphi 0, %s24
      %s18 = sphi 0, %s16
      %s19 = sphi 0, %s17
      %s20 = sphi 0, %s18
      %s21 = sphi 0, %s19
      %s33 = sphi 0, %s35
      %s36 = sphi 0, %s33
      %s37 = sphi 0, %s36
      %s53 = sphi 0, %s37
      %s61 = sphi 0, %s63
      %s64 = sphi 0, %s61
      %s65 = sphi 0, %s64
      %s81 = sphi 0, %s65
      %s89 = sphi 0, %s91
      %s92 = sphi 0, %s89
      %s93 = sphi 0, %s92
      %s109 = sphi 0, %s93
      %s117 = sphi 0, %s119
      %s120 = sphi 0, %s117
      %s121 = sphi 0, %s120
      %s137 = sphi 0, %s121
    $region4: #{perceptual_loss.7} parent=1 // loop_header_branch
      %12 = sbr.rel (%p10) target = $region8
    $region5: #{perceptual_loss.7} parent=1 // loop_body
      %s14 = ssub.s32 %s9, 1
      %s15 = ssub.s32 %s9, 2
      %s22 = sadd.s32 1, %s17
      %p23 = scmp.ge.s32.totalorder %s22, 1
      %s24 = scalar_select %p23, 0, %s22
      %s25 = sadd.s32 1, %s16
      %s26 = scalar_select %p23, %s25, %s16
      %p27 = scmp.ge.s32.totalorder %s26, 2
      %s28 = scalar_select %p27, 0, %s26
      %s29 = ssub.s32 %s16, %s28
      %s30 = ssub.s32 %s17, %s24
      %s31 = sor.u32 %s29, %s30
      %p32 = scmp.eq.s32.totalorder %s31, 0
      %s34 = sadd.s32 %s33, 1
      %s35 = scalar_select %p32, %s33, %s34
      %p38 = pneg %p32
      %p39 = scmp.eq.s32.totalorder %s9, 1
      %p40 = por %p38, %p39
      %p41 = scmp.ne.s32.totalorder %s33, %s36
      %p42 = scmp.eq.s32.totalorder %s9, 0
      %p43 = por %p41, %p42
      %p44 = scmp.ne.s32.totalorder %s33, %s36
      %p45 = scmp.eq.s32.totalorder %s14, 1
      %p46 = por %p44, %p45
      %p47 = scmp.ne.s32.totalorder %s36, %s37
      %p48 = scmp.eq.s32.totalorder %s14, 0
      %p49 = por %p47, %p48
      %p50 = scmp.ne.s32.totalorder %s36, %s37
      %p51 = scmp.eq.s32.totalorder %s15, 1
      %p52 = por %p50, %p51
      %p54 = scmp.ne.s32.totalorder %s37, %s53
      %p55 = scmp.eq.s32.totalorder %s15, 0
      %p56 = por %p54, %p55
      %s57 = ssub.s32 %s16, %s28
      %s58 = ssub.s32 %s17, %s24
      %s59 = sor.u32 %s57, %s58
      %p60 = scmp.eq.s32.totalorder %s59, 0
      %s62 = sadd.s32 %s61, 1
      %s63 = scalar_select %p60, %s61, %s62
      %p66 = pneg %p60
      %p67 = scmp.eq.s32.totalorder %s9, 1
      %p68 = por %p66, %p67
      %p69 = scmp.ne.s32.totalorder %s61, %s64
      %p70 = scmp.eq.s32.totalorder %s9, 0
      %p71 = por %p69, %p70
      %p72 = scmp.ne.s32.totalorder %s61, %s64
      %p73 = scmp.eq.s32.totalorder %s14, 1
      %p74 = por %p72, %p73
      %p75 = scmp.ne.s32.totalorder %s64, %s65
      %p76 = scmp.eq.s32.totalorder %s14, 0
      %p77 = por %p75, %p76
      %p78 = scmp.ne.s32.totalorder %s64, %s65
      %p79 = scmp.eq.s32.totalorder %s15, 1
      %p80 = por %p78, %p79
      %p82 = scmp.ne.s32.totalorder %s65, %s81
      %p83 = scmp.eq.s32.totalorder %s15, 0
      %p84 = por %p82, %p83
      %s85 = ssub.s32 %s16, %s28
      %s86 = ssub.s32 %s17, %s24
      %s87 = sor.u32 %s85, %s86
      %p88 = scmp.eq.s32.totalorder %s87, 0
      %s90 = sadd.s32 %s89, 1
      %s91 = scalar_select %p88, %s89, %s90
      %p94 = pneg %p88
      %p95 = scmp.eq.s32.totalorder %s9, 1
      %p96 = por %p94, %p95
      %p97 = scmp.ne.s32.totalorder %s89, %s92
      %p98 = scmp.eq.s32.totalorder %s9, 0
      %p99 = por %p97, %p98
      %p100 = scmp.ne.s32.totalorder %s89, %s92
      %p101 = scmp.eq.s32.totalorder %s14, 1
      %p102 = por %p100, %p101
      %p103 = scmp.ne.s32.totalorder %s92, %s93
      %p104 = scmp.eq.s32.totalorder %s14, 0
      %p105 = por %p103, %p104
      %p106 = scmp.ne.s32.totalorder %s92, %s93
      %p107 = scmp.eq.s32.totalorder %s15, 1
      %p108 = por %p106, %p107
      %p110 = scmp.ne.s32.totalorder %s93, %s109
      %p111 = scmp.eq.s32.totalorder %s15, 0
      %p112 = por %p110, %p111
      %s113 = ssub.s32 %s16, %s28
      %s114 = ssub.s32 %s17, %s24
      %s115 = sor.u32 %s113, %s114
      %p116 = scmp.eq.s32.totalorder %s115, 0
      %s118 = sadd.s32 %s117, 1
      %s119 = scalar_select %p116, %s117, %s118
      %p122 = pneg %p116
      %p123 = scmp.eq.s32.totalorder %s9, 1
      %p124 = por %p122, %p123
      %p125 = scmp.ne.s32.totalorder %s117, %s120
      %p126 = scmp.eq.s32.totalorder %s9, 0
      %p127 = por %p125, %p126
      %p128 = scmp.ne.s32.totalorder %s117, %s120
      %p129 = scmp.eq.s32.totalorder %s14, 1
      %p130 = por %p128, %p129
      %p131 = scmp.ne.s32.totalorder %s120, %s121
      %p132 = scmp.eq.s32.totalorder %s14, 0
      %p133 = por %p131, %p132
      %p134 = scmp.ne.s32.totalorder %s120, %s121
      %p135 = scmp.eq.s32.totalorder %s15, 1
      %p136 = por %p134, %p135
      %p138 = scmp.ne.s32.totalorder %s121, %s137
      %p139 = scmp.eq.s32.totalorder %s15, 0
      %p140 = por %p138, %p139
      %p141 = scmp.le.s32.totalorder 1, %s9
      %p142 = scmp.lt.s32.totalorder %s9, 3
      %p143 = pnand %p141, %p142
      %p144 = pneg %p143
      // Predicated region
      $region9: #{perceptual_loss.7} parent=5 // pred_check
        _
      $region10: #{perceptual_loss.7} parent=5 // pred_check_branch
        %146 = sbr.rel (%p143) target = $region12
      $region11: #{perceptual_loss.7} parent=5 // pred_region
        %s147 = ssub.s32 %s9, 1
      $region12: #{perceptual_loss.7} parent=5 // pred_fallthru
        _
      %p148 = scmp.lt.s32.totalorder %s9, 2
      // Predicated region
      $region13: #{perceptual_loss.7} parent=5 // pred_check
        %p149 = pneg %p148
      $region14: #{perceptual_loss.7} parent=5 // pred_check_branch
        %151 = sbr.rel (%p149) target = $region16
      $region15: #{perceptual_loss.7} parent=5 // pred_region
        // Predicated region
        $region17: #{perceptual_loss.7} parent=15 // pred_check
          %p152 = pneg %p43
        $region18: #{perceptual_loss.7} parent=15 // pred_check_branch
          %154 = sbr.rel (%p152) target = $region20
        $region19: #{perceptual_loss.7} parent=15 // pred_region
          %s155 = smul.u32 2, %s17
          %p156 = scmp.lt.s32.totalorder %s16, 1
          %s157 = scalar_select %p156, %s16, 1
          %p158 = scmp.lt.s32.totalorder %s155, 1
          %s159 = scalar_select %p158, %s155, 1
          %s160 = smul.addr %s157, 2
          %s161 = sadd.s32 %s159, %s160
          %s162 = smul.addr %s161, 4
          %s163 = scalar_lea.vmem %s0, %s162
          %s164 = smul.u32 2, %s17
        $region20: #{perceptual_loss.7} parent=15 // pred_fallthru
          _
        // Predicated region
        $region21: #{perceptual_loss.7} parent=15 // pred_check
          %p165 = pneg %p71
        $region22: #{perceptual_loss.7} parent=15 // pred_check_branch
          %167 = sbr.rel (%p165) target = $region24
        $region23: #{perceptual_loss.7} parent=15 // pred_region
          %s168 = smul.u32 2, %s17
          %p169 = scmp.lt.s32.totalorder %s16, 1
          %s170 = scalar_select %p169, %s16, 1
          %p171 = scmp.lt.s32.totalorder %s168, 1
          %s172 = scalar_select %p171, %s168, 1
          %s173 = smul.addr %s170, 2
          %s174 = sadd.s32 %s172, %s173
          %s175 = smul.addr %s174, 4
          %s176 = scalar_lea.vmem %s1, %s175
          %s177 = smul.u32 2, %s17
        $region24: #{perceptual_loss.7} parent=15 // pred_fallthru
          _
        // Predicated region
        $region25: #{perceptual_loss.7} parent=15 // pred_check
          %p178 = pneg %p99
        $region26: #{perceptual_loss.7} parent=15 // pred_check_branch
          %180 = sbr.rel (%p178) target = $region28
        $region27: #{perceptual_loss.7} parent=15 // pred_region
          %s181 = smul.u32 2, %s17
          %p182 = scmp.lt.s32.totalorder %s16, 1
          %s183 = scalar_select %p182, %s16, 1
          %p184 = scmp.lt.s32.totalorder %s181, 1
          %s185 = scalar_select %p184, %s181, 1
          %s186 = smul.addr %s183, 2
          %s187 = sadd.s32 %s185, %s186
          %s188 = scalar_lea.vmem %s2, %s187
          %s189 = smul.u32 2, %s17
        $region28: #{perceptual_loss.7} parent=15 // pred_fallthru
          _
      $region16: #{perceptual_loss.7} parent=5 // pred_fallthru
        _
      %p190 = scmp.le.s32.totalorder 1, %s9
      %p191 = scmp.lt.s32.totalorder %s9, 3
      %p192 = pnand %p190, %p191
      %p193 = pneg %p192
      // Predicated region
      $region29: #{perceptual_loss.7} parent=5 // pred_check
        _
      $region30: #{perceptual_loss.7} parent=5 // pred_check_branch
        %195 = sbr.rel (%p192) target = $region32
      $region31: #{perceptual_loss.7} parent=5 // pred_region
        %s196 = ssub.s32 %s9, 1
        %s197 = smul.u32 2, %s19
        %p198 = scmp.lt.s32.totalorder %s18, 1
        %s199 = scalar_select %p198, %s18, 1
        %p200 = scmp.lt.s32.totalorder %s197, 1
        %s201 = scalar_select %p200, %s197, 1
        %s202 = smul.addr %s199, 2
        %s203 = sadd.s32 %s201, %s202
        %s204 = smul.addr %s203, 4
        %s205 = scalar_lea.vmem %s0, %s204
        %p206 = pneg %p49
        %p207 = pneg %p46
        %s208 = smul.u32 2, %s19
        %p209 = scmp.lt.s32.totalorder %s18, 1
        %s210 = scalar_select %p209, %s18, 1
        %p211 = scmp.lt.s32.totalorder %s208, 1
        %s212 = scalar_select %p211, %s208, 1
        %s213 = smul.addr %s210, 2
        %s214 = sadd.s32 %s212, %s213
        %s215 = smul.addr %s214, 4
        %s216 = scalar_lea.vmem %s1, %s215
        %p217 = pneg %p77
        %p218 = pneg %p74
        %s219 = smul.u32 2, %s19
        %p220 = scmp.lt.s32.totalorder %s18, 1
        %s221 = scalar_select %p220, %s18, 1
        %p222 = scmp.lt.s32.totalorder %s219, 1
        %s223 = scalar_select %p222, %s219, 1
        %s224 = smul.addr %s221, 2
        %s225 = sadd.s32 %s223, %s224
        %s226 = scalar_lea.vmem %s2, %s225
        %p227 = pneg %p105
        %p228 = pneg %p102
        %p229 = pneg %p133
        %p230 = pneg %p130
        %s231 = sand.u32 %s120, 1
        %s232 = sand.u32 %s120, 1
        %s233 = smul.addr %s232, 24
        %s234 = scalar_lea.vmem [#allocation2], %s233
        %s235 = smul.u32 2, %s19
        %p236 = scmp.lt.s32.totalorder %s18, 1
        %s237 = scalar_select %p236, %s18, 1
        %p238 = scmp.lt.s32.totalorder %s235, 1
        %s239 = scalar_select %p238, %s235, 1
        %s240 = smul.addr %s237, 2
        %s241 = sadd.s32 %s239, %s240
        %s242 = smul.addr %s241, 4
        %s243 = scalar_lea.vmem %s0, %s242
        %s244 = smul.u32 2, %s19
        %s245 = smul.u32 2, %s19
        %p246 = scmp.lt.s32.totalorder %s18, 1
        %s247 = scalar_select %p246, %s18, 1
        %p248 = scmp.lt.s32.totalorder %s245, 1
        %s249 = scalar_select %p248, %s245, 1
        %s250 = smul.addr %s247, 2
        %s251 = sadd.s32 %s249, %s250
        %s252 = smul.addr %s251, 4
        %s253 = scalar_lea.vmem %s1, %s252
        %s254 = smul.u32 2, %s19
        %s255 = smul.u32 2, %s19
        %p256 = scmp.lt.s32.totalorder %s18, 1
        %s257 = scalar_select %p256, %s18, 1
        %p258 = scmp.lt.s32.totalorder %s255, 1
        %s259 = scalar_select %p258, %s255, 1
        %s260 = smul.addr %s257, 2
        %s261 = sadd.s32 %s259, %s260
        %s262 = scalar_lea.vmem %s2, %s261
        %s263 = smul.u32 2, %s19
        %s264 = smul.u32 2, %s19
        %v265 = vld [vmem:[%s262] sm:$0x3]
        %v266 = vld [vmem:[%s243] sm:$0xff]
        %v267 = vld [vmem:[%s253] sm:$0xff]
        %268 = vst [vmem:[%s234] sm:$0xff] %v266
        %s269 = scalar_lea.vmem %s234, 8 [#allocation2]
        %270 = vst [vmem:[%s269] sm:$0xff] %v267
        %v271 = vsub.f32 1.0, %v265
        %v273 = vlaneseq
        %v274 = vshrl.u32 %v273, 7
        %v275 = vsub.s32 0, %v274
        %v276 = vrot.slane %v271, %v275
        %v277 = vlaneseq
        %v278 = vshrl.u32 %v277, 7
        %v279 = vsub.s32 1, %v278
        %v280 = vrot.slane %v271, %v279
        %v281 = vcombine.low %v276, %v280
        %v283 = vmul.f32 %v266, %v281
        %v285 = vlaneseq
        %v286 = vshrl.u32 %v285, 7
        %v287 = vsub.s32 0, %v286
        %v288 = vrot.slane %v265, %v287
        %v289 = vlaneseq
        %v290 = vshrl.u32 %v289, 7
        %v291 = vsub.s32 1, %v290
        %v292 = vrot.slane %v265, %v291
        %v293 = vcombine.low %v288, %v292
        %v295 = vmul.f32 %v267, %v293
        %v296 = vadd.f32 %v283, %v295
        %s297 = scalar_lea.vmem %s234, 16 [#allocation2]
        %298 = vst [vmem:[%s297] sm:$0xff] %v296
        %s299 = sand.u32 %s120, 1
        %s300 = sand.u32 %s120, 1
        %s301 = smul.addr %s300, 24
        %s302 = scalar_lea.vmem [#allocation2], %s301
        // Predicated region
        $region33: #{perceptual_loss.7} parent=31 // pred_check
          %p303 = pneg %p130
        $region34: #{perceptual_loss.7} parent=31 // pred_check_branch
          %305 = sbr.rel (%p303) target = $region36
        $region35: #{perceptual_loss.7} parent=31 // pred_region
          %s306 = smul.u32 2, %s19
          %s307 = smul.addr %s18, 2
          %s308 = sadd.s32 %s306, %s307
          %s309 = smul.addr %s308, 4
          %s310 = scalar_lea.vmem %s3, %s309
          // Predicated region
          $region37: #{perceptual_loss.7} parent=35 // pred_check
            _
          $region38: #{perceptual_loss.7} parent=35 // pred_check_branch
            %312 = sbr.rel (0) target = $region40
          $region39: #{perceptual_loss.7} parent=35 // pred_region
            // Predicated region
            $region41: #{perceptual_loss.7} parent=39 // pred_check
              _
            $region42: #{perceptual_loss.7} parent=39 // pred_check_branch
              %314 = sbr.rel (0) target = $region44
            $region43: #{perceptual_loss.7} parent=39 // pred_region
              // Predicated region
              $region56: #{perceptual_loss.7} parent=43 // pred_check
                _
              $region57: #{perceptual_loss.7} parent=43 // pred_check_branch
                %334 = sbr.rel (0) target = $region59
              $region58: #{perceptual_loss.7} parent=43 // pred_region
                loop: start=0, step=1, limit=1
                $region60: #{perceptual_loss.7} parent=58 // loop_pre_header
                  _
                $region61: #{perceptual_loss.7} parent=58 // loop_header
                  %s336 = sphi 0, %s340
                  %p337 = scmp.ge.s32.totalorder %s336, 1
                  %s341 = sphi %s302, %s302
                  %s342 = sphi %s310, %s310
                $region62: #{perceptual_loss.7} parent=58 // loop_header_branch
                  %339 = sbr.rel (%p337) target = $region66
                $region63: #{perceptual_loss.7} parent=58 // loop_body
                  %v343 = vld [vmem:[%s341] sm:$0xff]
                  %344 = vst [vmem:[%s342] sm:$0xff] %v343
                  %v345 = vld [vmem:[%s341 + $0x8] sm:$0xff]
                  %346 = vst [vmem:[%s342 + $0x10] sm:$0xff] %v345
                  %v347 = vld [vmem:[%s341 + $0x10] sm:$0xff]
                  %348 = vst [vmem:[%s342 + $0x20] sm:$0xff] %v347
                $region64: #{perceptual_loss.7} parent=58 // loop_footer
                  %s340 = sadd.s32 1, %s336
                $region65: #{perceptual_loss.7} parent=58 // loop_footer_branch
                  %335 = sbr.rel target = $region61
                $region66: #{perceptual_loss.7} parent=58 // loop_exit
                  _
              $region59: #{perceptual_loss.7} parent=43 // pred_fallthru
                _
              // Predicated region
              $region67: #{perceptual_loss.7} parent=43 // pred_check
                _
              $region68: #{perceptual_loss.7} parent=43 // pred_check_branch
                %350 = sbr.rel target = $region70
              $region69: #{perceptual_loss.7} parent=43 // pred_region
                _
              $region70: #{perceptual_loss.7} parent=43 // pred_fallthru
                _
            $region44: #{perceptual_loss.7} parent=39 // pred_fallthru
              _
            // Predicated region
            $region45: #{perceptual_loss.7} parent=39 // pred_check
              _
            $region46: #{perceptual_loss.7} parent=39 // pred_check_branch
              %316 = sbr.rel target = $region48
            $region47: #{perceptual_loss.7} parent=39 // pred_region
              %s318 = ssub.s32 256, 1
              loop: start=0, step=1, limit=1
              $region49: #{perceptual_loss.7} parent=47 // loop_pre_header
                _
              $region50: #{perceptual_loss.7} parent=47 // loop_header
                %s320 = sphi 0, %s324
                %p321 = scmp.ge.s32.totalorder %s320, 1
                %s325 = sphi %s302, %s302
                %s326 = sphi %s310, %s310
              $region51: #{perceptual_loss.7} parent=47 // loop_header_branch
                %323 = sbr.rel (%p321) target = $region55
              $region52: #{perceptual_loss.7} parent=47 // loop_body
                %v327 = vld [vmem:[%s325] sm:%s318]
                %328 = vst [vmem:[%s326] sm:%s318] %v327
                %v329 = vld [vmem:[%s325 + $0x8] sm:%s318]
                %330 = vst [vmem:[%s326 + $0x10] sm:%s318] %v329
                %v331 = vld [vmem:[%s325 + $0x10] sm:%s318]
                %332 = vst [vmem:[%s326 + $0x20] sm:%s318] %v331
              $region53: #{perceptual_loss.7} parent=47 // loop_footer
                %s324 = sadd.s32 1, %s320
              $region54: #{perceptual_loss.7} parent=47 // loop_footer_branch
                %319 = sbr.rel target = $region50
              $region55: #{perceptual_loss.7} parent=47 // loop_exit
                _
            $region48: #{perceptual_loss.7} parent=39 // pred_fallthru
              _
          $region40: #{perceptual_loss.7} parent=35 // pred_fallthru
            _
          %351 = vnop
        $region36: #{perceptual_loss.7} parent=31 // pred_fallthru
          _
      $region32: #{perceptual_loss.7} parent=5 // pred_fallthru
        _
      %p352 = scmp.le.s32.totalorder 2, %s9
      // Predicated region
      $region71: #{perceptual_loss.7} parent=5 // pred_check
        %p353 = pneg %p352
      $region72: #{perceptual_loss.7} parent=5 // pred_check_branch
        %355 = sbr.rel (%p353) target = $region74
      $region73: #{perceptual_loss.7} parent=5 // pred_region
        %s356 = ssub.s32 %s9, 2
        // Predicated region
        $region75: #{perceptual_loss.7} parent=73 // pred_check
          %p357 = pneg %p136
        $region76: #{perceptual_loss.7} parent=73 // pred_check_branch
          %359 = sbr.rel (%p357) target = $region78
        $region77: #{perceptual_loss.7} parent=73 // pred_region
          %s360 = sand.u32 %s121, 1
          %s361 = sand.u32 %s121, 1
          %s362 = smul.addr %s361, 24
          %s363 = scalar_lea.vmem [#allocation2], %s362
        $region78: #{perceptual_loss.7} parent=73 // pred_fallthru
          _
      $region74: #{perceptual_loss.7} parent=5 // pred_fallthru
        _
    $region6: #{perceptual_loss.7} parent=1 // loop_footer
      %s13 = sadd.s32 1, %s9
    $region7: #{perceptual_loss.7} parent=1 // loop_footer_branch
      %8 = sbr.rel target = $region3
    $region8: #{perceptual_loss.7} parent=1 // loop_exit
      _

// kernel: perceptual_loss.9
$region0: #{perceptual_loss.9}
  #allocation0 [shape = 'u32[]', space=smem, size = 0x4, offset = 0x4, fixed_abs, tag = 'smem constant byte address 0x4 - core index']
  #allocation1 [shape = 'u32[144,128]{1,0:T(1,128)}', space=vmem, size = 0x12000, scoped, tag = 'internal scratch']
  #allocation2 [shape = 'f32[1,1]{1,0:T(1,128)}', space=vmem, size = 0x200, scoped, tag = 'scratch operand']
  %s0 = inlined_call_operand.vmem [shape: f32[8,384], index: 0, kind: input, shape index: {}, may-alias: {0,1,2}]
  %s1 = inlined_call_operand.vmem [shape: f32[8,384], index: 1, kind: input, shape index: {}, may-alias: {0,1,2}]
  %s2 = inlined_call_operand.vmem [shape: f32[8,384], index: 2, kind: input, shape index: {}, may-alias: {0,1,2}]
  %s3 = inlined_call_operand.hbm [shape: f32[1,1], index: 3, kind: output, shape index: {}]
  %s4 = sld [smem:[#allocation0]]
  $region26: #{perceptual_loss.9} parent=0
    _
  %s6 = ssub.s32 1, %s4
  %s7 = scalar_select 0, %s6, %s4
  $region1: #{perceptual_loss.9} parent=0
    #allocation3 [shape = 'u8[512]{0}', space=vmem, size = 0x400, scoped, tag = 'output window, operand 0, single buffered']
    #allocation4 [shape = 's32[1]{0}', space=sflag, size = 0x4, scoped, tag = 'scoped memory for perceptual_loss.9']
    %8 = vsyncpa [#allocation4], 0
    // Predicated region
    $region2: #{perceptual_loss.9} parent=1 // pred_check
      _
    $region3: #{perceptual_loss.9} parent=1 // pred_check_branch
      %10 = sbr.rel (0) target = $region5
    $region4: #{perceptual_loss.9} parent=1 // pred_region
      _
    $region5: #{perceptual_loss.9} parent=1 // pred_fallthru
      _
    // Predicated region
    $region6: #{perceptual_loss.9} parent=1 // pred_check
      _
    $region7: #{perceptual_loss.9} parent=1 // pred_check_branch
      %12 = sbr.rel (0) target = $region9
    $region8: #{perceptual_loss.9} parent=1 // pred_region
      %s13 = sadd.s32 0, 1
      %p14 = scmp.lt.s32.totalorder %s13, 2
      %s15 = scalar_select %p14, %s13, 2
      %s16 = smul.addr %s15, 8
      %s17 = scalar_lea.vmem %s1, %s16
      %s18 = sadd.s32 0, 1
    $region9: #{perceptual_loss.9} parent=1 // pred_fallthru
      _
    // Predicated region
    $region10: #{perceptual_loss.9} parent=1 // pred_check
      _
    $region11: #{perceptual_loss.9} parent=1 // pred_check_branch
      %20 = sbr.rel (0) target = $region13
    $region12: #{perceptual_loss.9} parent=1 // pred_region
      %s21 = sadd.s32 0, 2
      %p22 = scmp.lt.s32.totalorder %s21, 2
      %s23 = scalar_select %p22, %s21, 2
      %s24 = smul.addr %s23, 8
      %s25 = scalar_lea.vmem %s2, %s24
      %s26 = sadd.s32 0, 2
    $region13: #{perceptual_loss.9} parent=1 // pred_fallthru
      _
    %s27 = sadd.s32 0, 1
    %p28 = scmp.lt.s32.totalorder %s27, 2
    %s29 = scalar_select %p28, %s27, 2
    %s30 = smul.addr %s29, 8
    %s31 = scalar_lea.vmem %s1, %s30
    %s32 = sadd.s32 0, 2
    %p33 = scmp.lt.s32.totalorder %s32, 2
    %s34 = scalar_select %p33, %s32, 2
    %s35 = smul.addr %s34, 8
    %s36 = scalar_lea.vmem %s2, %s35
    %s37 = sadd.s32 0, 1
    %p38 = scmp.lt.s32.totalorder %s37, 2
    %s39 = scalar_select %p38, %s37, 2
    %s40 = smul.addr %s39, 8
    %s41 = scalar_lea.vmem %s1, %s40
    %s42 = sadd.s32 0, 1
    %s43 = sadd.s32 0, 2
    %p44 = scmp.lt.s32.totalorder %s43, 2
    %s45 = scalar_select %p44, %s43, 2
    %s46 = smul.addr %s45, 8
    %s47 = scalar_lea.vmem %s2, %s46
    %s48 = sadd.s32 0, 2
    %p49 = scmp.eq.s32.totalorder 0, 0
    // Predicated region
    $region14: #{perceptual_loss.9} parent=1 // pred_check
      %p50 = pneg %p49
    $region15: #{perceptual_loss.9} parent=1 // pred_check_branch
      %52 = sbr.rel (%p50) target = $region17
    $region16: #{perceptual_loss.9} parent=1 // pred_region
      %vm53 = vcmask 0
      %54 = vst.msk [vmem:[#allocation2] sm:$0x1] %vm53, 0.0
    $region17: #{perceptual_loss.9} parent=1 // pred_fallthru
      _
    %v55 = vld [vmem:[%s41] sm:$0xff]
    %v56 = vld [vmem:[#allocation2] sm:$0x1]
    %v57 = vld [vmem:[%s0] sm:$0xff]
    %v58 = vsub.f32 %v57, %v55
    %v59 = vand.u32 2147483647, %v58
    %60 = vadd.xlane.f32.xlu0 %v59
    %v61 = vpop.xlane.xlu0 %60
    %v62 = vrot.slane %v61, 4
    %v63 = vadd.f32 %v61, %v62
    %v64 = vrot.slane %v63, 2
    %v65 = vadd.f32 %v63, %v64
    %v66 = vrot.slane %v65, 1
    %v67 = vadd.f32 %v65, %v66
    %s68 = vtos %v67
    %v69 = vstv %s68
    %v70 = vld [vmem:[%s47] sm:$0xff]
    %v71 = vsub.f32 %v70, %v55
    %v72 = vand.u32 2147483647, %v71
    %73 = vadd.xlane.f32.xlu0 %v72
    %v74 = vpop.xlane.xlu0 %73
    %v75 = vrot.slane %v74, 4
    %v76 = vadd.f32 %v74, %v75
    %v77 = vrot.slane %v76, 2
    %v78 = vadd.f32 %v76, %v77
    %v79 = vrot.slane %v78, 1
    %v80 = vadd.f32 %v78, %v79
    %s81 = vtos %v80
    %v82 = vstv %s81
    %v83 = vadd.f32 %v69, %v82
    %v84 = vadd.f32 %v56, %v83
    %vm85 = vcmask 0
    %86 = vst.msk [vmem:[#allocation2] sm:$0x1] %vm85, %v84
    %v87 = vld [vmem:[#allocation2] sm:$0x1]
    %88 = vst.msk [vmem:[#allocation3] sm:$0x1] %vm85, %v87
    // Predicated region
    $region18: #{perceptual_loss.9} parent=1 // pred_check
      _
    $region19: #{perceptual_loss.9} parent=1 // pred_check_branch
      %90 = sbr.rel (0) target = $region21
    $region20: #{perceptual_loss.9} parent=1 // pred_region
      %s92 = ssub.s32 16, 16
      %93 = vsyncadd [#allocation4], %s92
      %s95 = sshll.u32 [#allocation3], 4
      %s96 = int_to_ptr.vmem [resolvable:$true] %s95
      %98 = dma.vmem_to_hbm [thread:$0]  %s96, 16, %s3, [#allocation4]
    $region21: #{perceptual_loss.9} parent=1 // pred_fallthru
      _
    // Predicated region
    $region22: #{perceptual_loss.9} parent=1 // pred_check
      _
    $region23: #{perceptual_loss.9} parent=1 // pred_check_branch
      %100 = sbr.rel (0) target = $region25
    $region24: #{perceptual_loss.9} parent=1 // pred_region
      %101 = dma.done [#allocation4], 16
    $region25: #{perceptual_loss.9} parent=1 // pred_fallthru
      _
    %102 = vsyncpa [#allocation4], 1

// kernel: perceptual_loss.8
$region0: #{perceptual_loss.8}
  #allocation0 [shape = 'u32[]', space=smem, size = 0x4, offset = 0x4, fixed_abs, tag = 'smem constant byte address 0x4 - core index']
  #allocation1 [shape = 'u32[144,128]{1,0:T(1,128)}', space=vmem, size = 0x12000, scoped, tag = 'internal scratch']
  %s0 = inlined_call_operand.vmem [shape: bf16[8,36], index: 0, kind: input, shape index: {}]
  %s1 = inlined_call_operand.vmem [shape: bf16[36,384], index: 1, kind: input, shape index: {}]
  %s2 = inlined_call_operand.vmem [shape: f32[8,1], index: 2, kind: input, shape index: {}]
  %s3 = inlined_call_operand.vmem [shape: f32[8,384], index: 3, kind: output, shape index: {}]
  %s4 = sld [smem:[#allocation0]]
  $region22: #{perceptual_loss.8} parent=0
    _
  %s6 = ssub.s32 1, %s4
  %s7 = scalar_select 0, %s6, %s4
  // Predicated region
  $region2: #{perceptual_loss.8} parent=0 // pred_check
    _
  $region3: #{perceptual_loss.8} parent=0 // pred_check_branch
    %9 = sbr.rel (0) target = $region5
  $region4: #{perceptual_loss.8} parent=0 // pred_region
    _
  $region5: #{perceptual_loss.8} parent=0 // pred_fallthru
    _
  // Predicated region
  $region6: #{perceptual_loss.8} parent=0 // pred_check
    _
  $region7: #{perceptual_loss.8} parent=0 // pred_check_branch
    %11 = sbr.rel (0) target = $region9
  $region8: #{perceptual_loss.8} parent=0 // pred_region
    _
  $region9: #{perceptual_loss.8} parent=0 // pred_fallthru
    _
  // Predicated region
  $region10: #{perceptual_loss.8} parent=0 // pred_check
    _
  $region11: #{perceptual_loss.8} parent=0 // pred_check_branch
    %13 = sbr.rel (0) target = $region13
  $region12: #{perceptual_loss.8} parent=0 // pred_region
    _
  $region13: #{perceptual_loss.8} parent=0 // pred_fallthru
    _
  %v15 = vld [vmem:[%s0] sm:$0xf]
  %v16 = vld [vmem:[%s1] sm:$0xff]
  %v17 = vld [vmem:[%s1 + $0x8] sm:$0xf]
  %v18 = vld [vmem:[%s1 + $0xc] sm:$0xff]
  %v19 = vld [vmem:[%s1 + $0x14] sm:$0xf]
  %v20 = vld [vmem:[%s1 + $0x18] sm:$0xff]
  %v21 = vld [vmem:[%s1 + $0x20] sm:$0xf]
  %v22 = vld [vmem:[%s1 + $0x24] sm:$0xff]
  %v23 = vld [vmem:[%s1 + $0x2c] sm:$0xf]
  %v24 = vld [vmem:[%s1 + $0x30] sm:$0x33]
  %v25 = vld [vmem:[%s1 + $0x38] sm:$0x3]
  %v26 = vld [vmem:[%s2] sm:$0xff]
  %28 = vset.pattern.permute.xlu0 0
  %29 = vperm.xlu0 %28, %v26
  %v30 = vpop.permute.xlu0 %29
  %v42 = vunpack.c.l.b16 %v16
  %v43 = vunpack.c.h.b16 %v16
  %v44 = vunpack.c.l.b16 %v17
  %v45 = vunpack.c.l.b16 %v18
  %v46 = vunpack.c.h.b16 %v18
  %v47 = vunpack.c.l.b16 %v19
  %v48 = vunpack.c.l.b16 %v20
  %v49 = vunpack.c.h.b16 %v20
  %v50 = vunpack.c.l.b16 %v21
  %v51 = vunpack.c.l.b16 %v22
  %v52 = vunpack.c.h.b16 %v22
  %v53 = vunpack.c.l.b16 %v23
  %v54 = vunpack.c.l.b16 %v24
  %v55 = vunpack.c.h.b16 %v24
  %v56 = vunpack.c.l.b16 %v25
  %v57 = vpack.c.b16 %v45, %v42
  %v58 = vpack.c.b16 %v46, %v43
  %v59 = vpack.c.b16 %v47, %v44
  %v60 = vpack.c.b16 %v51, %v48
  %v61 = vpack.c.b16 %v52, %v49
  %v62 = vpack.c.b16 %v53, %v50
  %v63 = vpack.c.b16 %v54, %v54
  %v64 = vpack.c.b16 %v55, %v55
  %v65 = vpack.c.b16 %v56, %v56
  %vm72 = vcmask 293888
  %v74 = vsel %vm72, %v15, 0
  %vm76 = vcmask 1041408
  %v78 = vsel %vm76, %v63, 0
  %v81 = vsel %vm76, %v64, 0
  %v84 = vsel %vm76, %v65, 0
  %86 = vmatprep.subr.bf16.mxu0 0
  %87 = vmatpush1.bf16.msra.mxu0 0
  %88 = vmatprep.subr.bf16.mxu0 0
  %89 = vmatpush1.bf16.msra.mxu0 0
  %90 = vmatprep.subr.bf16.mxu0 0
  %91 = vmatpush1.bf16.msra.mxu0 0
  %92 = vmatprep.subr.bf16.mxu0 0
  %93 = vmatpush1.bf16.msra.mxu0 0
  %94 = vmatprep.subr.bf16.mxu0 0
  %95 = vmatpush1.bf16.msra.mxu0 0
  %96 = vmatprep.subr.bf16.mxu0 %v81
  %97 = vmatpush1.bf16.msra.mxu0 %v78
  %98 = vmatprep.subr.bf16.mxu0 %v61
  %99 = vmatpush1.bf16.msra.mxu0 %v60
  %100 = vmatprep.subr.bf16.mxu0 %v58
  %101 = vmatpush1.bf16.msra.mxu0 %v57
  %102 = vmatprep.subr.bf16.mxu0 0
  %103 = vmatpush2.bf16.msra.mxu0 0
  %104 = vmatprep.subr.bf16.mxu0 0
  %105 = vmatpush2.bf16.msra.mxu0 0
  %106 = vmatprep.subr.bf16.mxu0 0
  %107 = vmatpush2.bf16.msra.mxu0 0
  %108 = vmatprep.subr.bf16.mxu0 0
  %109 = vmatpush2.bf16.msra.mxu0 0
  %110 = vmatprep.subr.bf16.mxu0 0
  %111 = vmatpush2.bf16.msra.mxu0 0
  %112 = vmatprep.subr.bf16.mxu0 0
  %113 = vmatpush2.bf16.msra.mxu0 0
  %114 = vmatprep.subr.bf16.mxu0 0
  %115 = vmatpush2.bf16.msra.mxu0 0
  %116 = vmatprep.subr.bf16.mxu0 0
  %117 = vmatpush2.bf16.msra.mxu0 0
  %118 = vmatprep.mubr.bf16.mxu0 0
  %119 = vmatmul.mubr.bf16.gmra.mxu0 %v74
  %v120 = vpop.f32.mrf.mxu0
  %v121 = vadd.f32 %v30, %v120
  %v122 = vpop.f32.mrf.mxu0
  %v123 = vadd.f32 %v30, %v122
  %v124 = vpop.f32.mrf.mxu0
  %v125 = vpop.f32.mrf.mxu0
  %126 = vdwg.mxu0
  %127 = vmatprep.subr.bf16.mxu0 0
  %128 = vmatpush1.bf16.msra.mxu0 0
  %129 = vmatprep.subr.bf16.mxu0 0
  %130 = vmatpush1.bf16.msra.mxu0 0
  %131 = vmatprep.subr.bf16.mxu0 0
  %132 = vmatpush1.bf16.msra.mxu0 0
  %133 = vmatprep.subr.bf16.mxu0 0
  %134 = vmatpush1.bf16.msra.mxu0 0
  %135 = vmatprep.subr.bf16.mxu0 0
  %136 = vmatpush1.bf16.msra.mxu0 0
  %137 = vmatprep.subr.bf16.mxu0 0
  %138 = vmatpush1.bf16.msra.mxu0 %v84
  %139 = vmatprep.subr.bf16.mxu0 0
  %140 = vmatpush1.bf16.msra.mxu0 %v62
  %141 = vmatprep.subr.bf16.mxu0 0
  %142 = vmatpush1.bf16.msra.mxu0 %v59
  %143 = vmatprep.subr.bf16.mxu0 0
  %144 = vmatpush2.bf16.msra.mxu0 0
  %145 = vmatprep.subr.bf16.mxu0 0
  %146 = vmatpush2.bf16.msra.mxu0 0
  %147 = vmatprep.subr.bf16.mxu0 0
  %148 = vmatpush2.bf16.msra.mxu0 0
  %149 = vmatprep.subr.bf16.mxu0 0
  %150 = vmatpush2.bf16.msra.mxu0 0
  %151 = vmatprep.subr.bf16.mxu0 0
  %152 = vmatpush2.bf16.msra.mxu0 0
  %153 = vmatprep.subr.bf16.mxu0 0
  %154 = vmatpush2.bf16.msra.mxu0 0
  %155 = vmatprep.subr.bf16.mxu0 0
  %156 = vmatpush2.bf16.msra.mxu0 0
  %157 = vmatprep.subr.bf16.mxu0 0
  %158 = vmatpush2.bf16.msra.mxu0 0
  %159 = vmatprep.mubr.bf16.mxu0 0
  %160 = vmatmul.mubr.bf16.gmra.mxu0 %v74
  %v161 = vpop.f32.mrf.mxu0
  %v162 = vadd.f32 %v30, %v161
  %v163 = vpop.f32.mrf.mxu0
  %v164 = vpop.f32.mrf.mxu0
  %v165 = vpop.f32.mrf.mxu0
  %166 = vdwg.mxu0
  %v167 = vmax.f32 %v121, 0.0
  %v168 = vmax.f32 %v123, 0.0
  %v169 = vmax.f32 %v162, 0.0
  %170 = vst [vmem:[%s3] sm:$0xff] %v167
  %171 = vst [vmem:[%s3 + $0x8] sm:$0xff] %v168
  %172 = vst [vmem:[%s3 + $0x10] sm:$0xff] %v169
  // Predicated region
  $region14: #{perceptual_loss.8} parent=0 // pred_check
    _
  $region15: #{perceptual_loss.8} parent=0 // pred_check_branch
    %174 = sbr.rel (0) target = $region17
  $region16: #{perceptual_loss.8} parent=0 // pred_region
    _
  $region17: #{perceptual_loss.8} parent=0 // pred_fallthru
    _
  // Predicated region
  $region18: #{perceptual_loss.8} parent=0 // pred_check
    _
  $region19: #{perceptual_loss.8} parent=0 // pred_check_branch
    %176 = sbr.rel (0) target = $region21
  $region20: #{perceptual_loss.8} parent=0 // pred_region
    _
  $region21: #{perceptual_loss.8} parent=0 // pred_fallthru
    _

// kernel: perceptual_loss.11
$region0: #{perceptual_loss.11}
  #allocation0 [shape = 'u32[]', space=smem, size = 0x4, offset = 0x4, fixed_abs, tag = 'smem constant byte address 0x4 - core index']
  #allocation1 [shape = 'u32[144,128]{1,0:T(1,128)}', space=vmem, size = 0x12000, scoped, tag = 'internal scratch']
  #allocation2 [shape = 'f32[1,1]{1,0:T(1,128)}', space=vmem, size = 0x200, scoped, tag = 'scratch operand']
  %s0 = inlined_call_operand.vmem [shape: f32[16,32], index: 0, kind: input, shape index: {}]
  %s1 = inlined_call_operand.vmem [shape: f32[16,32], index: 1, kind: input, shape index: {}]
  %s2 = inlined_call_operand.vmem [shape: f32[16,32], index: 2, kind: input, shape index: {}]
  %s3 = inlined_call_operand.hbm [shape: f32[1,1], index: 3, kind: output, shape index: {}]
  %s4 = sld [smem:[#allocation0]]
  $region26: #{perceptual_loss.11} parent=0
    _
  %s6 = ssub.s32 1, %s4
  %s7 = scalar_select 0, %s6, %s4
  $region1: #{perceptual_loss.11} parent=0
    #allocation3 [shape = 'u8[512]{0}', space=vmem, size = 0x400, scoped, tag = 'output window, operand 0, single buffered']
    #allocation4 [shape = 's32[1]{0}', space=sflag, size = 0x4, scoped, tag = 'scoped memory for perceptual_loss.11']
    %8 = vsyncpa [#allocation4], 0
    // Predicated region
    $region2: #{perceptual_loss.11} parent=1 // pred_check
      _
    $region3: #{perceptual_loss.11} parent=1 // pred_check_branch
      %10 = sbr.rel (0) target = $region5
    $region4: #{perceptual_loss.11} parent=1 // pred_region
      _
    $region5: #{perceptual_loss.11} parent=1 // pred_fallthru
      _
    // Predicated region
    $region6: #{perceptual_loss.11} parent=1 // pred_check
      _
    $region7: #{perceptual_loss.11} parent=1 // pred_check_branch
      %12 = sbr.rel (0) target = $region9
    $region8: #{perceptual_loss.11} parent=1 // pred_region
      _
    $region9: #{perceptual_loss.11} parent=1 // pred_fallthru
      _
    // Predicated region
    $region10: #{perceptual_loss.11} parent=1 // pred_check
      _
    $region11: #{perceptual_loss.11} parent=1 // pred_check_branch
      %14 = sbr.rel (0) target = $region13
    $region12: #{perceptual_loss.11} parent=1 // pred_region
      _
    $region13: #{perceptual_loss.11} parent=1 // pred_fallthru
      _
    %p15 = scmp.eq.s32.totalorder 0, 0
    // Predicated region
    $region14: #{perceptual_loss.11} parent=1 // pred_check
      %p16 = pneg %p15
    $region15: #{perceptual_loss.11} parent=1 // pred_check_branch
      %18 = sbr.rel (%p16) target = $region17
    $region16: #{perceptual_loss.11} parent=1 // pred_region
      %vm19 = vcmask 0
      %20 = vst.msk [vmem:[#allocation2] sm:$0x1] %vm19, 0.0
    $region17: #{perceptual_loss.11} parent=1 // pred_fallthru
      _
    %v21 = vld [vmem:[%s1] sm:$0xff]
    %v22 = vld [vmem:[%s1 + $0x8] sm:$0xff]
    %v23 = vld [vmem:[#allocation2] sm:$0x1]
    %v24 = vld [vmem:[%s0] sm:$0xff]
    %v25 = vld [vmem:[%s0 + $0x8] sm:$0xff]
    %v26 = vsub.f32 %v24, %v21
    %v27 = vsub.f32 %v25, %v22
    %v28 = vand.u32 2147483647, %v26
    %v29 = vand.u32 2147483647, %v27
    %vm30 = vcmask 261120
    %v31 = vsel %vm30, %v28, 0.0
    %v32 = vsel %vm30, %v29, 0.0
    %v33 = vadd.f32 %v31, %v32
    %34 = vadd.xlane.f32.xlu0 %v33
    %v35 = vpop.xlane.xlu0 %34
    %v36 = vrot.slane %v35, 4
    %v37 = vadd.f32 %v35, %v36
    %v38 = vrot.slane %v37, 2
    %v39 = vadd.f32 %v37, %v38
    %v40 = vrot.slane %v39, 1
    %v41 = vadd.f32 %v39, %v40
    %s42 = vtos %v41
    %v43 = vstv %s42
    %v44 = vld [vmem:[%s2] sm:$0xff]
    %v45 = vld [vmem:[%s2 + $0x8] sm:$0xff]
    %v46 = vsub.f32 %v44, %v21
    %v47 = vsub.f32 %v45, %v22
    %v48 = vand.u32 2147483647, %v46
    %v49 = vand.u32 2147483647, %v47
    %v50 = vsel %vm30, %v48, 0.0
    %v51 = vsel %vm30, %v49, 0.0
    %v52 = vadd.f32 %v50, %v51
    %53 = vadd.xlane.f32.xlu0 %v52
    %v54 = vpop.xlane.xlu0 %53
    %v55 = vrot.slane %v54, 4
    %v56 = vadd.f32 %v54, %v55
    %v57 = vrot.slane %v56, 2
    %v58 = vadd.f32 %v56, %v57
    %v59 = vrot.slane %v58, 1
    %v60 = vadd.f32 %v58, %v59
    %s61 = vtos %v60
    %v62 = vstv %s61
    %v63 = vadd.f32 %v43, %v62
    %v64 = vadd.f32 %v23, %v63
    %vm65 = vcmask 0
    %66 = vst.msk [vmem:[#allocation2] sm:$0x1] %vm65, %v64
    %v67 = vld [vmem:[#allocation2] sm:$0x1]
    %68 = vst.msk [vmem:[#allocation3] sm:$0x1] %vm65, %v67
    // Predicated region
    $region18: #{perceptual_loss.11} parent=1 // pred_check
      _
    $region19: #{perceptual_loss.11} parent=1 // pred_check_branch
      %70 = sbr.rel (0) target = $region21
    $region20: #{perceptual_loss.11} parent=1 // pred_region
      %s72 = ssub.s32 16, 16
      %73 = vsyncadd [#allocation4], %s72
      %s75 = sshll.u32 [#allocation3], 4
      %s76 = int_to_ptr.vmem [resolvable:$true] %s75
      %78 = dma.vmem_to_hbm [thread:$0]  %s76, 16, %s3, [#allocation4]
    $region21: #{perceptual_loss.11} parent=1 // pred_fallthru
      _
    // Predicated region
    $region22: #{perceptual_loss.11} parent=1 // pred_check
      _
    $region23: #{perceptual_loss.11} parent=1 // pred_check_branch
      %80 = sbr.rel (0) target = $region25
    $region24: #{perceptual_loss.11} parent=1 // pred_region
      %81 = dma.done [#allocation4], 16
    $region25: #{perceptual_loss.11} parent=1 // pred_fallthru
      _
    %82 = vsyncpa [#allocation4], 1

// kernel: perceptual_loss.10
$region0: #{perceptual_loss.10}
  #allocation0 [shape = 'u32[]', space=smem, size = 0x4, offset = 0x4, fixed_abs, tag = 'smem constant byte address 0x4 - core index']
  #allocation1 [shape = 'u32[144,128]{1,0:T(1,128)}', space=vmem, size = 0x12000, scoped, tag = 'internal scratch']
  %s0 = inlined_call_operand.vmem [shape: bf16[16,72], index: 0, kind: input, shape index: {}]
  %s1 = inlined_call_operand.vmem [shape: bf16[72,96], index: 1, kind: input, shape index: {}]
  %s2 = inlined_call_operand.vmem [shape: f32[16,1], index: 2, kind: input, shape index: {}]
  %s3 = inlined_call_operand.vmem [shape: f32[16,96], index: 3, kind: output, shape index: {}]
  %s4 = sld [smem:[#allocation0]]
  $region22: #{perceptual_loss.10} parent=0
    _
  %s6 = ssub.s32 1, %s4
  %s7 = scalar_select 0, %s6, %s4
  // Predicated region
  $region2: #{perceptual_loss.10} parent=0 // pred_check
    _
  $region3: #{perceptual_loss.10} parent=0 // pred_check_branch
    %9 = sbr.rel (0) target = $region5
  $region4: #{perceptual_loss.10} parent=0 // pred_region
    _
  $region5: #{perceptual_loss.10} parent=0 // pred_fallthru
    _
  // Predicated region
  $region6: #{perceptual_loss.10} parent=0 // pred_check
    _
  $region7: #{perceptual_loss.10} parent=0 // pred_check_branch
    %11 = sbr.rel (0) target = $region9
  $region8: #{perceptual_loss.10} parent=0 // pred_region
    _
  $region9: #{perceptual_loss.10} parent=0 // pred_fallthru
    _
  // Predicated region
  $region10: #{perceptual_loss.10} parent=0 // pred_check
    _
  $region11: #{perceptual_loss.10} parent=0 // pred_check_branch
    %13 = sbr.rel (0) target = $region13
  $region12: #{perceptual_loss.10} parent=0 // pred_region
    _
  $region13: #{perceptual_loss.10} parent=0 // pred_fallthru
    _
  %v15 = vld [vmem:[%s0] sm:$0xf]
  %v16 = vld [vmem:[%s0 + $0x4] sm:$0xf]
  %v17 = vld [vmem:[%s1] sm:$0xf]
  %v18 = vld [vmem:[%s1 + $0x4] sm:$0xf]
  %v19 = vld [vmem:[%s1 + $0x8] sm:$0xf]
  %v20 = vld [vmem:[%s1 + $0xc] sm:$0xf]
  %v21 = vld [vmem:[%s1 + $0x10] sm:$0xf]
  %v22 = vld [vmem:[%s1 + $0x14] sm:$0xf]
  %v23 = vld [vmem:[%s1 + $0x18] sm:$0xf]
  %v24 = vld [vmem:[%s1 + $0x1c] sm:$0xf]
  %v25 = vld [vmem:[%s1 + $0x20] sm:$0xf]
  %v26 = vld [vmem:[%s2] sm:$0xff]
  %v27 = vld [vmem:[%s2 + $0x8] sm:$0xff]
  %29 = vset.pattern.permute.xlu0 0
  %30 = vperm.xlu0 %29, %v26
  %v31 = vpop.permute.xlu0 %30
  %34 = vset.pattern.permute.xlu0 0
  %35 = vperm.xlu0 %34, %v27
  %v36 = vpop.permute.xlu0 %35
  %v40 = vunpack.c.l.b16 %v15
  %v41 = vunpack.c.l.b16 %v16
  %v42 = vpack.c.b16 %v41, %v40
  %v52 = vunpack.c.l.b16 %v17
  %v53 = vunpack.c.l.b16 %v18
  %v54 = vunpack.c.l.b16 %v19
  %v55 = vunpack.c.l.b16 %v20
  %v56 = vunpack.c.l.b16 %v21
  %v57 = vunpack.c.l.b16 %v22
  %v58 = vunpack.c.l.b16 %v23
  %v59 = vunpack.c.l.b16 %v24
  %v60 = vunpack.c.l.b16 %v25
  %v61 = vpack.c.b16 %v53, %v52
  %v62 = vpack.c.b16 %v55, %v54
  %v63 = vpack.c.b16 %v57, %v56
  %v64 = vpack.c.b16 %v59, %v58
  %v65 = vpack.c.b16 %v60, %v60
  %vm70 = vcmask 588800
  %v72 = vsel %vm70, %v42, 0
  %vm74 = vcmask 1043456
  %v76 = vsel %vm74, %v65, 0
  %78 = vmatprep.subr.bf16.mxu0 0
  %79 = vmatpush1.bf16.msra.mxu0 0
  %80 = vmatprep.subr.bf16.mxu0 0
  %81 = vmatpush1.bf16.msra.mxu0 0
  %82 = vmatprep.subr.bf16.mxu0 0
  %83 = vmatpush1.bf16.msra.mxu0 0
  %84 = vmatprep.subr.bf16.mxu0 0
  %85 = vmatpush1.bf16.msra.mxu0 %v76
  %86 = vmatprep.subr.bf16.mxu0 0
  %87 = vmatpush1.bf16.msra.mxu0 %v64
  %88 = vmatprep.subr.bf16.mxu0 0
  %89 = vmatpush1.bf16.msra.mxu0 %v63
  %90 = vmatprep.subr.bf16.mxu0 0
  %91 = vmatpush1.bf16.msra.mxu0 %v62
  %92 = vmatprep.subr.bf16.mxu0 0
  %93 = vmatpush1.bf16.msra.mxu0 %v61
  %94 = vmatprep.subr.bf16.mxu0 0
  %95 = vmatpush2.bf16.msra.mxu0 0
  %96 = vmatprep.subr.bf16.mxu0 0
  %97 = vmatpush2.bf16.msra.mxu0 0
  %98 = vmatprep.subr.bf16.mxu0 0
  %99 = vmatpush2.bf16.msra.mxu0 0
  %100 = vmatprep.subr.bf16.mxu0 0
  %101 = vmatpush2.bf16.msra.mxu0 0
  %102 = vmatprep.subr.bf16.mxu0 0
  %103 = vmatpush2.bf16.msra.mxu0 0
  %104 = vmatprep.subr.bf16.mxu0 0
  %105 = vmatpush2.bf16.msra.mxu0 0
  %106 = vmatprep.subr.bf16.mxu0 0
  %107 = vmatpush2.bf16.msra.mxu0 0
  %108 = vmatprep.subr.bf16.mxu0 0
  %109 = vmatpush2.bf16.msra.mxu0 0
  %110 = vmatprep.mubr.bf16.mxu0 0
  %111 = vmatmul.mubr.bf16.gmra.mxu0 %v72
  %v112 = vpop.f32.mrf.mxu0
  %v113 = vadd.f32 %v31, %v112
  %v114 = vpop.f32.mrf.mxu0
  %v115 = vpop.f32.mrf.mxu0
  %v116 = vadd.f32 %v36, %v115
  %v117 = vpop.f32.mrf.mxu0
  %118 = vdwg.mxu0
  %v119 = vmax.f32 %v113, 0.0
  %v120 = vmax.f32 %v116, 0.0
  %vm121 = vcmask 785408
  %122 = vst.msk [vmem:[%s3] sm:$0xff] %vm121, %v119
  %123 = vst.msk [vmem:[%s3 + $0x8] sm:$0xff] %vm121, %v120
  // Predicated region
  $region14: #{perceptual_loss.10} parent=0 // pred_check
    _
  $region15: #{perceptual_loss.10} parent=0 // pred_check_branch
    %125 = sbr.rel (0) target = $region17
  $region16: #{perceptual_loss.10} parent=0 // pred_region
    _
  $region17: #{perceptual_loss.10} parent=0 // pred_fallthru
    _
  // Predicated region
  $region18: #{perceptual_loss.10} parent=0 // pred_check
    _
  $region19: #{perceptual_loss.10} parent=0 // pred_check_branch
    %127 = sbr.rel (0) target = $region21
  $region20: #{perceptual_loss.10} parent=0 // pred_region
    _
  $region21: #{perceptual_loss.10} parent=0 // pred_fallthru
    _

// kernel: perceptual_loss.13
$region0: #{perceptual_loss.13}
  #allocation0 [shape = 'u32[]', space=smem, size = 0x4, offset = 0x4, fixed_abs, tag = 'smem constant byte address 0x4 - core index']
  #allocation1 [shape = 'u32[144,128]{1,0:T(1,128)}', space=vmem, size = 0x12000, scoped, tag = 'internal scratch']
  #allocation2 [shape = 'f32[1,1]{1,0:T(1,128)}', space=vmem, size = 0x200, scoped, tag = 'scratch operand']
  %s0 = inlined_call_operand.vmem [shape: f32[32,8], index: 0, kind: input, shape index: {}]
  %s1 = inlined_call_operand.vmem [shape: f32[32,8], index: 1, kind: input, shape index: {}]
  %s2 = inlined_call_operand.vmem [shape: f32[32,8], index: 2, kind: input, shape index: {}]
  %s3 = inlined_call_operand.hbm [shape: f32[1,1], index: 3, kind: output, shape index: {}]
  %s4 = sld [smem:[#allocation0]]
  $region26: #{perceptual_loss.13} parent=0
    _
  %s6 = ssub.s32 1, %s4
  %s7 = scalar_select 0, %s6, %s4
  $region1: #{perceptual_loss.13} parent=0
    #allocation3 [shape = 'u8[512]{0}', space=vmem, size = 0x400, scoped, tag = 'output window, operand 0, single buffered']
    #allocation4 [shape = 's32[1]{0}', space=sflag, size = 0x4, scoped, tag = 'scoped memory for perceptual_loss.13']
    %8 = vsyncpa [#allocation4], 0
    // Predicated region
    $region2: #{perceptual_loss.13} parent=1 // pred_check
      _
    $region3: #{perceptual_loss.13} parent=1 // pred_check_branch
      %10 = sbr.rel (0) target = $region5
    $region4: #{perceptual_loss.13} parent=1 // pred_region
      _
    $region5: #{perceptual_loss.13} parent=1 // pred_fallthru
      _
    // Predicated region
    $region6: #{perceptual_loss.13} parent=1 // pred_check
      _
    $region7: #{perceptual_loss.13} parent=1 // pred_check_branch
      %12 = sbr.rel (0) target = $region9
    $region8: #{perceptual_loss.13} parent=1 // pred_region
      _
    $region9: #{perceptual_loss.13} parent=1 // pred_fallthru
      _
    // Predicated region
    $region10: #{perceptual_loss.13} parent=1 // pred_check
      _
    $region11: #{perceptual_loss.13} parent=1 // pred_check_branch
      %14 = sbr.rel (0) target = $region13
    $region12: #{perceptual_loss.13} parent=1 // pred_region
      _
    $region13: #{perceptual_loss.13} parent=1 // pred_fallthru
      _
    %p15 = scmp.eq.s32.totalorder 0, 0
    // Predicated region
    $region14: #{perceptual_loss.13} parent=1 // pred_check
      %p16 = pneg %p15
    $region15: #{perceptual_loss.13} parent=1 // pred_check_branch
      %18 = sbr.rel (%p16) target = $region17
    $region16: #{perceptual_loss.13} parent=1 // pred_region
      %vm19 = vcmask 0
      %20 = vst.msk [vmem:[#allocation2] sm:$0x1] %vm19, 0.0
    $region17: #{perceptual_loss.13} parent=1 // pred_fallthru
      _
    %v21 = vld [vmem:[%s1] sm:$0xff]
    %v22 = vld [vmem:[%s1 + $0x8] sm:$0xff]
    %v23 = vld [vmem:[%s1 + $0x10] sm:$0xff]
    %v24 = vld [vmem:[%s1 + $0x18] sm:$0xff]
    %v25 = vld [vmem:[#allocation2] sm:$0x1]
    %v26 = vld [vmem:[%s0] sm:$0xff]
    %v27 = vld [vmem:[%s0 + $0x8] sm:$0xff]
    %v28 = vld [vmem:[%s0 + $0x10] sm:$0xff]
    %v29 = vld [vmem:[%s0 + $0x18] sm:$0xff]
    %v30 = vsub.f32 %v26, %v21
    %v31 = vsub.f32 %v27, %v22
    %v32 = vsub.f32 %v28, %v23
    %v33 = vsub.f32 %v29, %v24
    %v34 = vand.u32 2147483647, %v30
    %v35 = vand.u32 2147483647, %v31
    %v36 = vand.u32 2147483647, %v32
    %v37 = vand.u32 2147483647, %v33
    %vm38 = vcmask 64512
    %v39 = vsel %vm38, %v34, 0.0
    %v40 = vsel %vm38, %v35, 0.0
    %v41 = vadd.f32 %v39, %v40
    %v42 = vsel %vm38, %v36, 0.0
    %v43 = vadd.f32 %v41, %v42
    %v44 = vsel %vm38, %v37, 0.0
    %v45 = vadd.f32 %v43, %v44
    %46 = vadd.xlane.f32.xlu0 %v45
    %v47 = vpop.xlane.xlu0 %46
    %v48 = vrot.slane %v47, 4
    %v49 = vadd.f32 %v47, %v48
    %v50 = vrot.slane %v49, 2
    %v51 = vadd.f32 %v49, %v50
    %v52 = vrot.slane %v51, 1
    %v53 = vadd.f32 %v51, %v52
    %s54 = vtos %v53
    %v55 = vstv %s54
    %v56 = vld [vmem:[%s2] sm:$0xff]
    %v57 = vld [vmem:[%s2 + $0x8] sm:$0xff]
    %v58 = vld [vmem:[%s2 + $0x10] sm:$0xff]
    %v59 = vld [vmem:[%s2 + $0x18] sm:$0xff]
    %v60 = vsub.f32 %v56, %v21
    %v61 = vsub.f32 %v57, %v22
    %v62 = vsub.f32 %v58, %v23
    %v63 = vsub.f32 %v59, %v24
    %v64 = vand.u32 2147483647, %v60
    %v65 = vand.u32 2147483647, %v61
    %v66 = vand.u32 2147483647, %v62
    %v67 = vand.u32 2147483647, %v63
    %v68 = vsel %vm38, %v64, 0.0
    %v69 = vsel %vm38, %v65, 0.0
    %v70 = vadd.f32 %v68, %v69
    %v71 = vsel %vm38, %v66, 0.0
    %v72 = vadd.f32 %v70, %v71
    %v73 = vsel %vm38, %v67, 0.0
    %v74 = vadd.f32 %v72, %v73
    %75 = vadd.xlane.f32.xlu0 %v74
    %v76 = vpop.xlane.xlu0 %75
    %v77 = vrot.slane %v76, 4
    %v78 = vadd.f32 %v76, %v77
    %v79 = vrot.slane %v78, 2
    %v80 = vadd.f32 %v78, %v79
    %v81 = vrot.slane %v80, 1
    %v82 = vadd.f32 %v80, %v81
    %s83 = vtos %v82
    %v84 = vstv %s83
    %v85 = vadd.f32 %v55, %v84
    %v86 = vadd.f32 %v25, %v85
    %vm87 = vcmask 0
    %88 = vst.msk [vmem:[#allocation2] sm:$0x1] %vm87, %v86
    %v89 = vld [vmem:[#allocation2] sm:$0x1]
    %90 = vst.msk [vmem:[#allocation3] sm:$0x1] %vm87, %v89
    // Predicated region
    $region18: #{perceptual_loss.13} parent=1 // pred_check
      _
    $region19: #{perceptual_loss.13} parent=1 // pred_check_branch
      %92 = sbr.rel (0) target = $region21
    $region20: #{perceptual_loss.13} parent=1 // pred_region
      %s94 = ssub.s32 16, 16
      %95 = vsyncadd [#allocation4], %s94
      %s97 = sshll.u32 [#allocation3], 4
      %s98 = int_to_ptr.vmem [resolvable:$true] %s97
      %100 = dma.vmem_to_hbm [thread:$0]  %s98, 16, %s3, [#allocation4]
    $region21: #{perceptual_loss.13} parent=1 // pred_fallthru
      _
    // Predicated region
    $region22: #{perceptual_loss.13} parent=1 // pred_check
      _
    $region23: #{perceptual_loss.13} parent=1 // pred_check_branch
      %102 = sbr.rel (0) target = $region25
    $region24: #{perceptual_loss.13} parent=1 // pred_region
      %103 = dma.done [#allocation4], 16
    $region25: #{perceptual_loss.13} parent=1 // pred_fallthru
      _
    %104 = vsyncpa [#allocation4], 1

// kernel: perceptual_loss.12
$region0: #{perceptual_loss.12}
  #allocation0 [shape = 'u32[]', space=smem, size = 0x4, offset = 0x4, fixed_abs, tag = 'smem constant byte address 0x4 - core index']
  #allocation1 [shape = 'u32[144,128]{1,0:T(1,128)}', space=vmem, size = 0x12000, scoped, tag = 'internal scratch']
  %s0 = inlined_call_operand.vmem [shape: bf16[32,144], index: 0, kind: input, shape index: {}]
  %s1 = inlined_call_operand.vmem [shape: bf16[144,24], index: 1, kind: input, shape index: {}]
  %s2 = inlined_call_operand.vmem [shape: f32[32,1], index: 2, kind: input, shape index: {}]
  %s3 = inlined_call_operand.vmem [shape: f32[32,24], index: 3, kind: output, shape index: {}]
  %s4 = sld [smem:[#allocation0]]
  $region22: #{perceptual_loss.12} parent=0
    _
  %s6 = ssub.s32 1, %s4
  %s7 = scalar_select 0, %s6, %s4
  // Predicated region
  $region2: #{perceptual_loss.12} parent=0 // pred_check
    _
  $region3: #{perceptual_loss.12} parent=0 // pred_check_branch
    %9 = sbr.rel (0) target = $region5
  $region4: #{perceptual_loss.12} parent=0 // pred_region
    _
  $region5: #{perceptual_loss.12} parent=0 // pred_fallthru
    _
  // Predicated region
  $region6: #{perceptual_loss.12} parent=0 // pred_check
    _
  $region7: #{perceptual_loss.12} parent=0 // pred_check_branch
    %11 = sbr.rel (0) target = $region9
  $region8: #{perceptual_loss.12} parent=0 // pred_region
    _
  $region9: #{perceptual_loss.12} parent=0 // pred_fallthru
    _
  // Predicated region
  $region10: #{perceptual_loss.12} parent=0 // pred_check
    _
  $region11: #{perceptual_loss.12} parent=0 // pred_check_branch
    %13 = sbr.rel (0) target = $region13
  $region12: #{perceptual_loss.12} parent=0 // pred_region
    _
  $region13: #{perceptual_loss.12} parent=0 // pred_fallthru
    _
  %v15 = vld [vmem:[%s0] sm:$0xff]
  %v16 = vld [vmem:[%s0 + $0x8] sm:$0xff]
  %v17 = vld [vmem:[%s0 + $0x10] sm:$0xff]
  %v18 = vld [vmem:[%s0 + $0x18] sm:$0xff]
  %v19 = vld [vmem:[%s1] sm:$0xf]
  %v20 = vld [vmem:[%s1 + $0x4] sm:$0xf]
  %v21 = vld [vmem:[%s1 + $0x8] sm:$0xf]
  %v22 = vld [vmem:[%s1 + $0xc] sm:$0xf]
  %v23 = vld [vmem:[%s1 + $0x10] sm:$0xf]
  %v24 = vld [vmem:[%s1 + $0x14] sm:$0xf]
  %v25 = vld [vmem:[%s1 + $0x18] sm:$0xf]
  %v26 = vld [vmem:[%s1 + $0x1c] sm:$0xf]
  %v27 = vld [vmem:[%s1 + $0x20] sm:$0xf]
  %v28 = vld [vmem:[%s1 + $0x24] sm:$0xf]
  %v29 = vld [vmem:[%s1 + $0x28] sm:$0xf]
  %v30 = vld [vmem:[%s1 + $0x2c] sm:$0xf]
  %v31 = vld [vmem:[%s1 + $0x30] sm:$0xf]
  %v32 = vld [vmem:[%s1 + $0x34] sm:$0xf]
  %v33 = vld [vmem:[%s1 + $0x38] sm:$0xf]
  %v34 = vld [vmem:[%s1 + $0x3c] sm:$0xf]
  %v35 = vld [vmem:[%s1 + $0x40] sm:$0xf]
  %v36 = vld [vmem:[%s1 + $0x44] sm:$0xf]
  %v37 = vld [vmem:[%s2] sm:$0xff]
  %v38 = vld [vmem:[%s2 + $0x8] sm:$0xff]
  %v39 = vld [vmem:[%s2 + $0x10] sm:$0xff]
  %v40 = vld [vmem:[%s2 + $0x18] sm:$0xff]
  %42 = vset.pattern.permute.xlu0 0
  %43 = vperm.xlu0 %42, %v37
  %v44 = vpop.permute.xlu0 %43
  %47 = vset.pattern.permute.xlu0 0
  %48 = vperm.xlu0 %47, %v38
  %v49 = vpop.permute.xlu0 %48
  %52 = vset.pattern.permute.xlu0 0
  %53 = vperm.xlu0 %52, %v39
  %v54 = vpop.permute.xlu0 %53
  %57 = vset.pattern.permute.xlu0 0
  %58 = vperm.xlu0 %57, %v40
  %v59 = vpop.permute.xlu0 %58
  %v65 = vunpack.c.l.b16 %v15
  %v66 = vunpack.c.h.b16 %v15
  %v67 = vunpack.c.l.b16 %v16
  %v68 = vunpack.c.h.b16 %v16
  %v69 = vunpack.c.l.b16 %v17
  %v70 = vunpack.c.h.b16 %v17
  %v71 = vunpack.c.l.b16 %v18
  %v72 = vunpack.c.h.b16 %v18
  %v73 = vpack.c.b16 %v67, %v65
  %v74 = vpack.c.b16 %v68, %v66
  %v75 = vpack.c.b16 %v71, %v69
  %v76 = vpack.c.b16 %v72, %v70
  %v97 = vunpack.c.l.b16 %v19
  %v98 = vunpack.c.l.b16 %v20
  %v99 = vunpack.c.l.b16 %v21
  %v100 = vunpack.c.l.b16 %v22
  %v101 = vunpack.c.l.b16 %v23
  %v102 = vunpack.c.l.b16 %v24
  %v103 = vunpack.c.l.b16 %v25
  %v104 = vunpack.c.l.b16 %v26
  %v105 = vunpack.c.l.b16 %v27
  %v106 = vunpack.c.l.b16 %v28
  %v107 = vunpack.c.l.b16 %v29
  %v108 = vunpack.c.l.b16 %v30
  %v109 = vunpack.c.l.b16 %v31
  %v110 = vunpack.c.l.b16 %v32
  %v111 = vunpack.c.l.b16 %v33
  %v112 = vunpack.c.l.b16 %v34
  %v113 = vunpack.c.l.b16 %v35
  %v114 = vunpack.c.l.b16 %v36
  %v115 = vpack.c.b16 %v98, %v97
  %v116 = vpack.c.b16 %v100, %v99
  %v117 = vpack.c.b16 %v102, %v101
  %v118 = vpack.c.b16 %v104, %v103
  %v119 = vpack.c.b16 %v106, %v105
  %v120 = vpack.c.b16 %v108, %v107
  %v121 = vpack.c.b16 %v110, %v109
  %v122 = vpack.c.b16 %v112, %v111
  %v123 = vpack.c.b16 %v114, %v113
  %vm133 = vcmask 130048
  %v135 = vsel %vm133, %v74, 0
  %v138 = vsel %vm133, %v76, 0
  %140 = vmatprep.subr.bf16.mxu0 0
  %141 = vmatpush1.bf16.msra.mxu0 %v122
  %142 = vmatprep.subr.bf16.mxu0 0
  %143 = vmatpush1.bf16.msra.mxu0 %v121
  %144 = vmatprep.subr.bf16.mxu0 0
  %145 = vmatpush1.bf16.msra.mxu0 %v120
  %146 = vmatprep.subr.bf16.mxu0 0
  %147 = vmatpush1.bf16.msra.mxu0 %v119
  %148 = vmatprep.subr.bf16.mxu0 0
  %149 = vmatpush1.bf16.msra.mxu0 %v118
  %150 = vmatprep.subr.bf16.mxu0 0
  %151 = vmatpush1.bf16.msra.mxu0 %v117
  %152 = vmatprep.subr.bf16.mxu0 0
  %153 = vmatpush1.bf16.msra.mxu0 %v116
  %154 = vmatprep.subr.bf16.mxu0 0
  %155 = vmatpush1.bf16.msra.mxu0 %v115
  %156 = vmatprep.subr.bf16.mxu0 0
  %157 = vmatpush2.bf16.msra.mxu0 0
  %158 = vmatprep.subr.bf16.mxu0 0
  %159 = vmatpush2.bf16.msra.mxu0 0
  %160 = vmatprep.subr.bf16.mxu0 0
  %161 = vmatpush2.bf16.msra.mxu0 0
  %162 = vmatprep.subr.bf16.mxu0 0
  %163 = vmatpush2.bf16.msra.mxu0 0
  %164 = vmatprep.subr.bf16.mxu0 0
  %165 = vmatpush2.bf16.msra.mxu0 0
  %166 = vmatprep.subr.bf16.mxu0 0
  %167 = vmatpush2.bf16.msra.mxu0 0
  %168 = vmatprep.subr.bf16.mxu0 0
  %169 = vmatpush2.bf16.msra.mxu0 0
  %170 = vmatprep.subr.bf16.mxu0 0
  %171 = vmatpush2.bf16.msra.mxu0 %v123
  %172 = vmatprep.mubr.bf16.mxu0 %v135
  %173 = vmatmul.mubr.bf16.gmra.mxu0 %v73
  %v174 = vpop.f32.mrf.mxu0
  %v175 = vadd.f32 %v44, %v174
  %v176 = vpop.f32.mrf.mxu0
  %v177 = vpop.f32.mrf.mxu0
  %v178 = vadd.f32 %v49, %v177
  %v179 = vpop.f32.mrf.mxu0
  %180 = vmatprep.mubr.bf16.mxu0 %v138
  %181 = vmatmul.mubr.bf16.gmra.mxu0 %v75
  %v182 = vpop.f32.mrf.mxu0
  %v183 = vadd.f32 %v54, %v182
  %v184 = vpop.f32.mrf.mxu0
  %v185 = vpop.f32.mrf.mxu0
  %v186 = vadd.f32 %v59, %v185
  %v187 = vpop.f32.mrf.mxu0
  %188 = vdwg.mxu0
  %v189 = vmax.f32 %v175, 0.0
  %v190 = vmax.f32 %v178, 0.0
  %v191 = vmax.f32 %v183, 0.0
  %v192 = vmax.f32 %v186, 0.0
  %vm193 = vcmask 195584
  %194 = vst.msk [vmem:[%s3] sm:$0xff] %vm193, %v189
  %195 = vst.msk [vmem:[%s3 + $0x8] sm:$0xff] %vm193, %v190
  %196 = vst.msk [vmem:[%s3 + $0x10] sm:$0xff] %vm193, %v191
  %197 = vst.msk [vmem:[%s3 + $0x18] sm:$0xff] %vm193, %v192
  // Predicated region
  $region14: #{perceptual_loss.12} parent=0 // pred_check
    _
  $region15: #{perceptual_loss.12} parent=0 // pred_check_branch
    %199 = sbr.rel (0) target = $region17
  $region16: #{perceptual_loss.12} parent=0 // pred_region
    _
  $region17: #{perceptual_loss.12} parent=0 // pred_fallthru
    _
  // Predicated region
  $region18: #{perceptual_loss.12} parent=0 // pred_check
    _
  $region19: #{perceptual_loss.12} parent=0 // pred_check_branch
    %201 = sbr.rel (0) target = $region21
  $region20: #{perceptual_loss.12} parent=0 // pred_region
    _
  $region21: #{perceptual_loss.12} parent=0 // pred_fallthru
    _

</llo_original>
